<compile_context>
chip_gen: v7x
topology: tpu7x:2x2x1
jax: 0.10.0
libtpu: 0.0.40
codegen_flags: <defaults>
</compile_context>

<pallas_src>
import jax
import jax.numpy as jnp
from jax.experimental import pallas as pl
from jax.experimental.pallas import tpu as pltpu

NEG_SLOPE = 0.01  # torch.nn.LeakyReLU default negative_slope


def _round_up(x, m):
    return ((x + m - 1) // m) * m


def _gemm_bias_lrelu_kernel(w_ref, p_ref, b_ref, o_ref):
    """o = leaky_relu(w @ p + b); w:(Cout,K) bf16, p:(K,TM) bf16, b:(Cout,1) f32."""
    acc = jnp.dot(w_ref[...], p_ref[...], preferred_element_type=jnp.float32)
    acc = acc + b_ref[...]                       # (Cout,1) broadcast over lanes
    acc = jnp.where(acc >= 0, acc, NEG_SLOPE * acc)
    o_ref[...] = acc.astype(o_ref.dtype)


def conv2d_lrelu_pallas(x_cnhw, w_flat, b_col, kh, kw, sh, sw, out_dtype):
    """Valid-padding strided Conv2d + LeakyReLU, channel-major layout.

    x_cnhw : (Cin, N, H, W) f32 or bf16
    w_flat : (Cout, Cin*kh*kw) bf16, PyTorch flattening order (c, i, j)
    b_col  : (Cout, 1) f32
    returns: (Cout, N, OH, OW) in out_dtype
    """
    Cin, N, H, W = x_cnhw.shape
    Cout, K = w_flat.shape
    assert K == Cin * kh * kw
    OH = (H - kh) // sh + 1
    OW = (W - kw) // sw + 1
    M = N * OH * OW

    # im2col without any transpose: row index = c*kh*kw + i*kw + j (matches
    # PyTorch weight.reshape(Cout, Cin*kh*kw) flattening).
    taps = [x_cnhw[:, :, i:i + sh * OH:sh, j:j + sw * OW:sw]
            for i in range(kh) for j in range(kw)]           # each (Cin,N,OH,OW)
    p = jnp.stack(taps, axis=1).reshape(K, M).astype(jnp.bfloat16)

    # Lane-dense tiling of M: tile is a multiple of 128, M padded up to it.
    TM = min(1024, _round_up(M, 128))
    Mpad = _round_up(M, TM)
    if Mpad != M:
        p = jnp.pad(p, ((0, 0), (0, Mpad - M)))

    out = pl.pallas_call(
        _gemm_bias_lrelu_kernel,
        out_shape=jax.ShapeDtypeStruct((Cout, Mpad), out_dtype),
        grid=(Mpad // TM,),
        in_specs=[
            pl.BlockSpec((Cout, K), lambda m: (0, 0)),   # weights: VMEM-resident
            pl.BlockSpec((K, TM), lambda m: (0, m)),     # patches: tiled over M
            pl.BlockSpec((Cout, 1), lambda m: (0, 0)),   # bias: VMEM-resident
        ],
        out_specs=pl.BlockSpec((Cout, TM), lambda m: (0, m)),
        compiler_params=pltpu.CompilerParams(
            dimension_semantics=("parallel",)),
    )(w_flat, p, b_col)

    return out[:, :M].reshape(Cout, N, OH, OW)


def init_params(key):
    """Deterministic synthetic weights; shapes/init match the nn.Conv2d layers."""
    specs = [
        # (Cout, Cin, kh, kw, stride)
        (8, 4, 4, 4, (2, 2)),
        (16, 8, 4, 4, (2, 2)),
        (16, 16, 3, 3, (2, 2)),
        (32, 16, 3, 3, (2, 2)),
    ]
    params = []
    for idx, (co, ci, kh, kw, st) in enumerate(specs):
        kw_key, kb_key = jax.random.split(jax.random.fold_in(key, idx))
        fan_in = ci * kh * kw
        bound = 1.0 / jnp.sqrt(fan_in)
        w = jax.random.uniform(kw_key, (co, ci, kh, kw), jnp.float32, -bound, bound)
        b = jax.random.uniform(kb_key, (co,), jnp.float32, -bound, bound)
        params.append((w, b, st))
    return params


def prepare_params(params):
    """Kernel-side layout: flattened bf16 weights (layer-1 absorbs the /255),
    column-vector f32 biases, plus static conv geometry."""
    prepared = []
    for idx, (w, b, (sh, sw)) in enumerate(params):
        co, ci, kh, kw = w.shape
        w_flat = w.reshape(co, ci * kh * kw)
        if idx == 0:
            w_flat = w_flat * (1.0 / 255.0)      # fold input normalisation into W1
        prepared.append((w_flat.astype(jnp.bfloat16),
                         b.reshape(co, 1).astype(jnp.float32),
                         (kh, kw), (sh, sw)))
    return prepared


def cnn_block_sketch_forward(depth_nchw, prepared):
    """CNNBlock_Sketch.forward: /255 (folded into W1), 4x (conv + LeakyReLU), flatten."""
    # single boundary transpose into channel-major (C, N, H, W)
    x = depth_nchw.astype(jnp.float32).transpose(1, 0, 2, 3)
    last = len(prepared) - 1
    for idx, (w_flat, b_col, (kh, kw), (sh, sw)) in enumerate(prepared):
        # intermediates in bf16 (next GEMM eats bf16 anyway); final layer f32.
        out_dtype = jnp.float32 if idx == last else jnp.bfloat16
        x = conv2d_lrelu_pallas(x, w_flat, b_col, kh, kw, sh, sw, out_dtype)
    # single boundary transpose back; matches torch.flatten(NCHW output, 1)
    n = x.shape[1]
    return x.transpose(1, 0, 2, 3).reshape(n, -1)


def _reference_forward(depth_nchw, params):
    """Pure-JAX f32 reference with PyTorch semantics (for a sanity check)."""
    x = depth_nchw.astype(jnp.float32) / 255.0
    for w, b, (sh, sw) in params:
        x = jax.lax.conv_general_dilated(
            x, w, window_strides=(sh, sw), padding="VALID",
            dimension_numbers=("NCHW", "OIHW", "NCHW"))
        x = x + b.reshape(1, -1, 1, 1)
        x = jnp.where(x >= 0, x, NEG_SLOPE * x)
    return x.reshape(x.shape[0], -1)


if __name__ == "__main__":
    key = jax.random.PRNGKey(0)
    pkey, xkey = jax.random.split(key)
    params = init_params(pkey)
    prepared = prepare_params(params)

    # Small but valid spatial size for 4 strided valid convs:
    # 64 -> 31 -> 14 -> 6 -> 2  => final features = 32 * 2 * 2 = 128
    x = jax.random.uniform(xkey, (2, 4, 64, 64), jnp.float32, 0.0, 255.0)

    fwd = jax.jit(lambda inp: cnn_block_sketch_forward(inp, prepared))
    out = jax.block_until_ready(fwd(x))

    assert out.shape == (2, 32 * 2 * 2), out.shape
    assert bool(jnp.isfinite(out).all())

    ref = _reference_forward(x, params)
    max_err = float(jnp.max(jnp.abs(out - ref)))
    assert max_err < 5e-2, max_err   # bf16 GEMM inputs/intermediates, f32 accumulate

    print("KERNEL_OK")
</pallas_src>

<mosaic_0001>
module attributes {stable_mosaic.version = 11 : i64} {
  func.func @_gemm_bias_lrelu_kernel(%arg0: i32, %arg1: memref<8x64xbf16, #tpu.memory_space<vmem>>, %arg2: memref<64x1024xbf16, #tpu.memory_space<vmem>>, %arg3: memref<8x1xf32, #tpu.memory_space<vmem>>, %arg4: memref<8x1024xbf16, #tpu.memory_space<vmem>>) attributes {dimension_semantics = [#tpu.dimension_semantics<parallel>], iteration_bounds = array<i64: 2>, scalar_prefetch = 0 : i64, scratch_operands = 0 : i64, tpu.core_type = #tpu.core_type<tc>, window_params = [{pipeline_mode = #tpu.pipeline_mode<synchronous>, transform_indices = @transform_0, window_bounds = array<i64: 8, 64>}, {transform_indices = @transform_1, window_bounds = array<i64: 64, 1024>}, {pipeline_mode = #tpu.pipeline_mode<synchronous>, transform_indices = @transform_2, window_bounds = array<i64: 8, 1>}, {transform_indices = @transform_3, window_bounds = array<i64: 8, 1024>}]} {
    %c0 = arith.constant 0 : index
    %c0_0 = arith.constant 0 : index
    %0 = vector.load %arg1[%c0, %c0_0] : memref<8x64xbf16, #tpu.memory_space<vmem>>, vector<8x64xbf16>
    %c0_1 = arith.constant 0 : index
    %c0_2 = arith.constant 0 : index
    %1 = vector.load %arg2[%c0_1, %c0_2] : memref<64x1024xbf16, #tpu.memory_space<vmem>>, vector<64x1024xbf16>
    %cst = arith.constant dense<0.000000e+00> : vector<8x1024xf32>
    %2 = tpu.matmul %0, %1, %cst {dimension_numbers = #tpu.dot_dimension_numbers<[1], [0], [0], [1], [0, 0, 1, 1], [], []>} : vector<8x64xbf16>, vector<64x1024xbf16>, vector<8x1024xf32> -> vector<8x1024xf32>
    %c0_3 = arith.constant 0 : index
    %c0_4 = arith.constant 0 : index
    %3 = vector.load %arg3[%c0_3, %c0_4] : memref<8x1xf32, #tpu.memory_space<vmem>>, vector<8x1xf32>
    %4 = vector.broadcast %3 : vector<8x1xf32> to vector<8x1024xf32>
    %5 = arith.addf %2, %4 : vector<8x1024xf32>
    %cst_5 = arith.constant 0.000000e+00 : f32
    %6 = vector.broadcast %cst_5 : f32 to vector<8x1024xf32>
    %7 = arith.cmpf oge, %5, %6 : vector<8x1024xf32>
    %cst_6 = arith.constant 0.00999999977 : f32
    %8 = vector.broadcast %cst_6 : f32 to vector<8x1024xf32>
    %9 = arith.mulf %8, %5 : vector<8x1024xf32>
    %10 = arith.select %7, %5, %9 : vector<8x1024xi1>, vector<8x1024xf32>
    %11 = arith.truncf %10 : vector<8x1024xf32> to vector<8x1024xbf16>
    %c0_7 = arith.constant 0 : index
    %c0_8 = arith.constant 0 : index
    %12 = vector.load %arg4[%c0_7, %c0_8] : memref<8x1024xbf16, #tpu.memory_space<vmem>>, vector<8x1024xbf16>
    tpu.vector_store %arg4[%c0_7, %c0_8], %11 {strides = array<i32>} : memref<8x1024xbf16, #tpu.memory_space<vmem>>, vector<8x1024xbf16>,
    return
  }
  func.func @transform_0(%arg0: i32) -> (i32, i32) {
    %c0_i32 = arith.constant 0 : i32
    %c0_i32_0 = arith.constant 0 : i32
    %c0_i32_1 = arith.constant 0 : i32
    return %c0_i32, %c0_i32_0 : i32, i32
  }
  func.func @transform_1(%arg0: i32) -> (i32, i32) {
    %c0_i32 = arith.constant 0 : i32
    %c0_i32_0 = arith.constant 0 : i32
    return %c0_i32, %arg0 : i32, i32
  }
  func.func @transform_2(%arg0: i32) -> (i32, i32) {
    %c0_i32 = arith.constant 0 : i32
    %c0_i32_0 = arith.constant 0 : i32
    %c0_i32_1 = arith.constant 0 : i32
    return %c0_i32, %c0_i32_0 : i32, i32
  }
  func.func @transform_3(%arg0: i32) -> (i32, i32) {
    %c0_i32 = arith.constant 0 : i32
    %c0_i32_0 = arith.constant 0 : i32
    return %c0_i32, %arg0 : i32, i32
  }
}

module attributes {stable_mosaic.version = 11 : i64} {
  func.func @_gemm_bias_lrelu_kernel(%arg0: i32, %arg1: memref<16x128xbf16, #tpu.memory_space<vmem>>, %arg2: memref<128x512xbf16, #tpu.memory_space<vmem>>, %arg3: memref<16x1xf32, #tpu.memory_space<vmem>>, %arg4: memref<16x512xbf16, #tpu.memory_space<vmem>>) attributes {dimension_semantics = [#tpu.dimension_semantics<parallel>], iteration_bounds = array<i64: 1>, scalar_prefetch = 0 : i64, scratch_operands = 0 : i64, tpu.core_type = #tpu.core_type<tc>, window_params = [{pipeline_mode = #tpu.pipeline_mode<synchronous>, transform_indices = @transform_0, window_bounds = array<i64: 16, 128>}, {transform_indices = @transform_1, window_bounds = array<i64: 128, 512>}, {pipeline_mode = #tpu.pipeline_mode<synchronous>, transform_indices = @transform_2, window_bounds = array<i64: 16, 1>}, {transform_indices = @transform_3, window_bounds = array<i64: 16, 512>}]} {
    %c0 = arith.constant 0 : index
    %c0_0 = arith.constant 0 : index
    %0 = vector.load %arg1[%c0, %c0_0] : memref<16x128xbf16, #tpu.memory_space<vmem>>, vector<16x128xbf16>
    %c0_1 = arith.constant 0 : index
    %c0_2 = arith.constant 0 : index
    %1 = vector.load %arg2[%c0_1, %c0_2] : memref<128x512xbf16, #tpu.memory_space<vmem>>, vector<128x512xbf16>
    %cst = arith.constant dense<0.000000e+00> : vector<16x512xf32>
    %2 = tpu.matmul %0, %1, %cst {dimension_numbers = #tpu.dot_dimension_numbers<[1], [0], [0], [1], [0, 0, 1, 1], [], []>} : vector<16x128xbf16>, vector<128x512xbf16>, vector<16x512xf32> -> vector<16x512xf32>
    %c0_3 = arith.constant 0 : index
    %c0_4 = arith.constant 0 : index
    %3 = vector.load %arg3[%c0_3, %c0_4] : memref<16x1xf32, #tpu.memory_space<vmem>>, vector<16x1xf32>
    %4 = vector.broadcast %3 : vector<16x1xf32> to vector<16x512xf32>
    %5 = arith.addf %2, %4 : vector<16x512xf32>
    %cst_5 = arith.constant 0.000000e+00 : f32
    %6 = vector.broadcast %cst_5 : f32 to vector<16x512xf32>
    %7 = arith.cmpf oge, %5, %6 : vector<16x512xf32>
    %cst_6 = arith.constant 0.00999999977 : f32
    %8 = vector.broadcast %cst_6 : f32 to vector<16x512xf32>
    %9 = arith.mulf %8, %5 : vector<16x512xf32>
    %10 = arith.select %7, %5, %9 : vector<16x512xi1>, vector<16x512xf32>
    %11 = arith.truncf %10 : vector<16x512xf32> to vector<16x512xbf16>
    %c0_7 = arith.constant 0 : index
    %c0_8 = arith.constant 0 : index
    %12 = vector.load %arg4[%c0_7, %c0_8] : memref<16x512xbf16, #tpu.memory_space<vmem>>, vector<16x512xbf16>
    tpu.vector_store %arg4[%c0_7, %c0_8], %11 {strides = array<i32>} : memref<16x512xbf16, #tpu.memory_space<vmem>>, vector<16x512xbf16>,
    return
  }
  func.func @transform_0(%arg0: i32) -> (i32, i32) {
    %c0_i32 = arith.constant 0 : i32
    %c0_i32_0 = arith.constant 0 : i32
    %c0_i32_1 = arith.constant 0 : i32
    return %c0_i32, %c0_i32_0 : i32, i32
  }
  func.func @transform_1(%arg0: i32) -> (i32, i32) {
    %c0_i32 = arith.constant 0 : i32
    %c0_i32_0 = arith.constant 0 : i32
    return %c0_i32, %arg0 : i32, i32
  }
  func.func @transform_2(%arg0: i32) -> (i32, i32) {
    %c0_i32 = arith.constant 0 : i32
    %c0_i32_0 = arith.constant 0 : i32
    %c0_i32_1 = arith.constant 0 : i32
    return %c0_i32, %c0_i32_0 : i32, i32
  }
  func.func @transform_3(%arg0: i32) -> (i32, i32) {
    %c0_i32 = arith.constant 0 : i32
    %c0_i32_0 = arith.constant 0 : i32
    return %c0_i32, %arg0 : i32, i32
  }
}

module attributes {stable_mosaic.version = 11 : i64} {
  func.func @_gemm_bias_lrelu_kernel(%arg0: i32, %arg1: memref<16x144xbf16, #tpu.memory_space<vmem>>, %arg2: memref<144x128xbf16, #tpu.memory_space<vmem>>, %arg3: memref<16x1xf32, #tpu.memory_space<vmem>>, %arg4: memref<16x128xbf16, #tpu.memory_space<vmem>>) attributes {dimension_semantics = [#tpu.dimension_semantics<parallel>], iteration_bounds = array<i64: 1>, scalar_prefetch = 0 : i64, scratch_operands = 0 : i64, tpu.core_type = #tpu.core_type<tc>, window_params = [{pipeline_mode = #tpu.pipeline_mode<synchronous>, transform_indices = @transform_0, window_bounds = array<i64: 16, 144>}, {transform_indices = @transform_1, window_bounds = array<i64: 144, 128>}, {pipeline_mode = #tpu.pipeline_mode<synchronous>, transform_indices = @transform_2, window_bounds = array<i64: 16, 1>}, {transform_indices = @transform_3, window_bounds = array<i64: 16, 128>}]} {
    %c0 = arith.constant 0 : index
    %c0_0 = arith.constant 0 : index
    %0 = vector.load %arg1[%c0, %c0_0] : memref<16x144xbf16, #tpu.memory_space<vmem>>, vector<16x144xbf16>
    %c0_1 = arith.constant 0 : index
    %c0_2 = arith.constant 0 : index
    %1 = vector.load %arg2[%c0_1, %c0_2] : memref<144x128xbf16, #tpu.memory_space<vmem>>, vector<144x128xbf16>
    %cst = arith.constant dense<0.000000e+00> : vector<16x128xf32>
    %2 = tpu.matmul %0, %1, %cst {dimension_numbers = #tpu.dot_dimension_numbers<[1], [0], [0], [1], [0, 0, 1, 1], [], []>} : vector<16x144xbf16>, vector<144x128xbf16>, vector<16x128xf32> -> vector<16x128xf32>
    %c0_3 = arith.constant 0 : index
    %c0_4 = arith.constant 0 : index
    %3 = vector.load %arg3[%c0_3, %c0_4] : memref<16x1xf32, #tpu.memory_space<vmem>>, vector<16x1xf32>
    %4 = vector.broadcast %3 : vector<16x1xf32> to vector<16x128xf32>
    %5 = arith.addf %2, %4 : vector<16x128xf32>
    %cst_5 = arith.constant 0.000000e+00 : f32
    %6 = vector.broadcast %cst_5 : f32 to vector<16x128xf32>
    %7 = arith.cmpf oge, %5, %6 : vector<16x128xf32>
    %cst_6 = arith.constant 0.00999999977 : f32
    %8 = vector.broadcast %cst_6 : f32 to vector<16x128xf32>
    %9 = arith.mulf %8, %5 : vector<16x128xf32>
    %10 = arith.select %7, %5, %9 : vector<16x128xi1>, vector<16x128xf32>
    %11 = arith.truncf %10 : vector<16x128xf32> to vector<16x128xbf16>
    %c0_7 = arith.constant 0 : index
    %c0_8 = arith.constant 0 : index
    %12 = vector.load %arg4[%c0_7, %c0_8] : memref<16x128xbf16, #tpu.memory_space<vmem>>, vector<16x128xbf16>
    tpu.vector_store %arg4[%c0_7, %c0_8], %11 {strides = array<i32>} : memref<16x128xbf16, #tpu.memory_space<vmem>>, vector<16x128xbf16>,
    return
  }
  func.func @transform_0(%arg0: i32) -> (i32, i32) {
    %c0_i32 = arith.constant 0 : i32
    %c0_i32_0 = arith.constant 0 : i32
    %c0_i32_1 = arith.constant 0 : i32
    return %c0_i32, %c0_i32_0 : i32, i32
  }
  func.func @transform_1(%arg0: i32) -> (i32, i32) {
    %c0_i32 = arith.constant 0 : i32
    %c0_i32_0 = arith.constant 0 : i32
    return %c0_i32, %arg0 : i32, i32
  }
  func.func @transform_2(%arg0: i32) -> (i32, i32) {
    %c0_i32 = arith.constant 0 : i32
    %c0_i32_0 = arith.constant 0 : i32
    %c0_i32_1 = arith.constant 0 : i32
    return %c0_i32, %c0_i32_0 : i32, i32
  }
  func.func @transform_3(%arg0: i32) -> (i32, i32) {
    %c0_i32 = arith.constant 0 : i32
    %c0_i32_0 = arith.constant 0 : i32
    return %c0_i32, %arg0 : i32, i32
  }
}

module attributes {stable_mosaic.version = 11 : i64} {
  func.func @_gemm_bias_lrelu_kernel(%arg0: i32, %arg1: memref<32x144xbf16, #tpu.memory_space<vmem>>, %arg2: memref<144x128xbf16, #tpu.memory_space<vmem>>, %arg3: memref<32x1xf32, #tpu.memory_space<vmem>>, %arg4: memref<32x128xf32, #tpu.memory_space<vmem>>) attributes {dimension_semantics = [#tpu.dimension_semantics<parallel>], iteration_bounds = array<i64: 1>, scalar_prefetch = 0 : i64, scratch_operands = 0 : i64, tpu.core_type = #tpu.core_type<tc>, window_params = [{pipeline_mode = #tpu.pipeline_mode<synchronous>, transform_indices = @transform_0, window_bounds = array<i64: 32, 144>}, {transform_indices = @transform_1, window_bounds = array<i64: 144, 128>}, {pipeline_mode = #tpu.pipeline_mode<synchronous>, transform_indices = @transform_2, window_bounds = array<i64: 32, 1>}, {transform_indices = @transform_3, window_bounds = array<i64: 32, 128>}]} {
    %c0 = arith.constant 0 : index
    %c0_0 = arith.constant 0 : index
    %0 = vector.load %arg1[%c0, %c0_0] : memref<32x144xbf16, #tpu.memory_space<vmem>>, vector<32x144xbf16>
    %c0_1 = arith.constant 0 : index
    %c0_2 = arith.constant 0 : index
    %1 = vector.load %arg2[%c0_1, %c0_2] : memref<144x128xbf16, #tpu.memory_space<vmem>>, vector<144x128xbf16>
    %cst = arith.constant dense<0.000000e+00> : vector<32x128xf32>
    %2 = tpu.matmul %0, %1, %cst {dimension_numbers = #tpu.dot_dimension_numbers<[1], [0], [0], [1], [0, 0, 1, 1], [], []>} : vector<32x144xbf16>, vector<144x128xbf16>, vector<32x128xf32> -> vector<32x128xf32>
    %c0_3 = arith.constant 0 : index
    %c0_4 = arith.constant 0 : index
    %3 = vector.load %arg3[%c0_3, %c0_4] : memref<32x1xf32, #tpu.memory_space<vmem>>, vector<32x1xf32>
    %4 = vector.broadcast %3 : vector<32x1xf32> to vector<32x128xf32>
    %5 = arith.addf %2, %4 : vector<32x128xf32>
    %cst_5 = arith.constant 0.000000e+00 : f32
    %6 = vector.broadcast %cst_5 : f32 to vector<32x128xf32>
    %7 = arith.cmpf oge, %5, %6 : vector<32x128xf32>
    %cst_6 = arith.constant 0.00999999977 : f32
    %8 = vector.broadcast %cst_6 : f32 to vector<32x128xf32>
    %9 = arith.mulf %8, %5 : vector<32x128xf32>
    %10 = arith.select %7, %5, %9 : vector<32x128xi1>, vector<32x128xf32>
    %c0_7 = arith.constant 0 : index
    %c0_8 = arith.constant 0 : index
    %11 = vector.load %arg4[%c0_7, %c0_8] : memref<32x128xf32, #tpu.memory_space<vmem>>, vector<32x128xf32>
    tpu.vector_store %arg4[%c0_7, %c0_8], %10 {strides = array<i32>} : memref<32x128xf32, #tpu.memory_space<vmem>>, vector<32x128xf32>,
    return
  }
  func.func @transform_0(%arg0: i32) -> (i32, i32) {
    %c0_i32 = arith.constant 0 : i32
    %c0_i32_0 = arith.constant 0 : i32
    %c0_i32_1 = arith.constant 0 : i32
    return %c0_i32, %c0_i32_0 : i32, i32
  }
  func.func @transform_1(%arg0: i32) -> (i32, i32) {
    %c0_i32 = arith.constant 0 : i32
    %c0_i32_0 = arith.constant 0 : i32
    return %c0_i32, %arg0 : i32, i32
  }
  func.func @transform_2(%arg0: i32) -> (i32, i32) {
    %c0_i32 = arith.constant 0 : i32
    %c0_i32_0 = arith.constant 0 : i32
    %c0_i32_1 = arith.constant 0 : i32
    return %c0_i32, %c0_i32_0 : i32, i32
  }
  func.func @transform_3(%arg0: i32) -> (i32, i32) {
    %c0_i32 = arith.constant 0 : i32
    %c0_i32_0 = arith.constant 0 : i32
    return %c0_i32, %arg0 : i32, i32
  }
}

</mosaic_0001>

<llo_original>
// kernel: _lambda_.4
$region0: #{_lambda_.4}
  #allocation0 [shape = 'u32[]', space=smem, size = 0x4, offset = 0x4, fixed_abs, tag = 'smem constant byte address 0x4 - core index']
  #allocation1 [shape = 'u32[144,128]{1,0:T(1,128)}', space=vmem, size = 0x12000, scoped, tag = 'internal scratch']
  %s0 = inlined_call_operand.vmem [shape: bf16[8,64], index: 0, kind: input, shape index: {}]
  %s1 = inlined_call_operand.vmem [shape: bf16[64,2048], index: 1, kind: input, shape index: {}]
  %s2 = inlined_call_operand.vmem [shape: f32[8,1], index: 2, kind: input, shape index: {}]
  %s3 = inlined_call_operand.vmem [shape: bf16[8,2048], index: 3, kind: output, shape index: {}]
  %s4 = sld [smem:[#allocation0]]
  $region68: #{_lambda_.4} parent=0
    _
  %s6 = ssub.s32 1, %s4
  %s7 = scalar_select 0, %s6, %s4
  $region1: #{_lambda_.4} parent=0
    #allocation2 [shape = 'u8[262144]{0}', space=vmem, size = 0x40000, scoped, tag = 'input window, operand 1']
    loop: start=0, step=1, limit=4
    $region2: #{_lambda_.4} parent=1 // loop_pre_header
      _
    $region3: #{_lambda_.4} parent=1 // loop_header
      %s9 = sphi 0, %s13
      %p10 = scmp.ge.s32.totalorder %s9, 4
      %s17 = sphi 0, %s17
      %s19 = sphi 0, %s17
      %s20 = sphi 0, %s19
      %s34 = sphi 0, %s20
      %s40 = sphi 0, %s42
      %s43 = sphi 0, %s40
      %s44 = sphi 0, %s43
      %s60 = sphi 0, %s44
      %s64 = sphi 0, %s64
      %s66 = sphi 0, %s64
      %s67 = sphi 0, %s66
      %s81 = sphi 0, %s67
      %s87 = sphi 0, %s89
      %s90 = sphi 0, %s87
      %s91 = sphi 0, %s90
      %s107 = sphi 0, %s91
    $region4: #{_lambda_.4} parent=1 // loop_header_branch
      %12 = sbr.rel (%p10) target = $region8
    $region5: #{_lambda_.4} parent=1 // loop_body
      %s14 = ssub.s32 %s9, 1
      %s15 = ssub.s32 %s9, 2
      %s16 = sadd.s32 %s9, 1
      %s18 = sadd.s32 %s17, 1
      %p21 = scmp.eq.s32.totalorder %s9, 1
      %p22 = scmp.ne.s32.totalorder %s17, %s19
      %p23 = scmp.eq.s32.totalorder %s9, 0
      %p24 = por %p22, %p23
      %p25 = scmp.ne.s32.totalorder %s17, %s19
      %p26 = scmp.eq.s32.totalorder %s14, 1
      %p27 = por %p25, %p26
      %p28 = scmp.ne.s32.totalorder %s19, %s20
      %p29 = scmp.eq.s32.totalorder %s14, 0
      %p30 = por %p28, %p29
      %p31 = scmp.ne.s32.totalorder %s19, %s20
      %p32 = scmp.eq.s32.totalorder %s15, 1
      %p33 = por %p31, %p32
      %p35 = scmp.ne.s32.totalorder %s20, %s34
      %p36 = scmp.eq.s32.totalorder %s15, 0
      %p37 = por %p35, %p36
      %s38 = ssub.s32 %s9, %s16
      %p39 = scmp.eq.s32.totalorder %s38, 0
      %s41 = sadd.s32 %s40, 1
      %s42 = scalar_select %p39, %s40, %s41
      %p45 = pneg %p39
      %p46 = scmp.eq.s32.totalorder %s9, 1
      %p47 = por %p45, %p46
      %p48 = scmp.ne.s32.totalorder %s40, %s43
      %p49 = scmp.eq.s32.totalorder %s9, 0
      %p50 = por %p48, %p49
      %p51 = scmp.ne.s32.totalorder %s40, %s43
      %p52 = scmp.eq.s32.totalorder %s14, 1
      %p53 = por %p51, %p52
      %p54 = scmp.ne.s32.totalorder %s43, %s44
      %p55 = scmp.eq.s32.totalorder %s14, 0
      %p56 = por %p54, %p55
      %p57 = scmp.ne.s32.totalorder %s43, %s44
      %p58 = scmp.eq.s32.totalorder %s15, 1
      %p59 = por %p57, %p58
      %p61 = scmp.ne.s32.totalorder %s44, %s60
      %p62 = scmp.eq.s32.totalorder %s15, 0
      %p63 = por %p61, %p62
      %s65 = sadd.s32 %s64, 1
      %p68 = scmp.eq.s32.totalorder %s9, 1
      %p69 = scmp.ne.s32.totalorder %s64, %s66
      %p70 = scmp.eq.s32.totalorder %s9, 0
      %p71 = por %p69, %p70
      %p72 = scmp.ne.s32.totalorder %s64, %s66
      %p73 = scmp.eq.s32.totalorder %s14, 1
      %p74 = por %p72, %p73
      %p75 = scmp.ne.s32.totalorder %s66, %s67
      %p76 = scmp.eq.s32.totalorder %s14, 0
      %p77 = por %p75, %p76
      %p78 = scmp.ne.s32.totalorder %s66, %s67
      %p79 = scmp.eq.s32.totalorder %s15, 1
      %p80 = por %p78, %p79
      %p82 = scmp.ne.s32.totalorder %s67, %s81
      %p83 = scmp.eq.s32.totalorder %s15, 0
      %p84 = por %p82, %p83
      %s85 = ssub.s32 %s9, %s16
      %p86 = scmp.eq.s32.totalorder %s85, 0
      %s88 = sadd.s32 %s87, 1
      %s89 = scalar_select %p86, %s87, %s88
      %p92 = pneg %p86
      %p93 = scmp.eq.s32.totalorder %s9, 1
      %p94 = por %p92, %p93
      %p95 = scmp.ne.s32.totalorder %s87, %s90
      %p96 = scmp.eq.s32.totalorder %s9, 0
      %p97 = por %p95, %p96
      %p98 = scmp.ne.s32.totalorder %s87, %s90
      %p99 = scmp.eq.s32.totalorder %s14, 1
      %p100 = por %p98, %p99
      %p101 = scmp.ne.s32.totalorder %s90, %s91
      %p102 = scmp.eq.s32.totalorder %s14, 0
      %p103 = por %p101, %p102
      %p104 = scmp.ne.s32.totalorder %s90, %s91
      %p105 = scmp.eq.s32.totalorder %s15, 1
      %p106 = por %p104, %p105
      %p108 = scmp.ne.s32.totalorder %s91, %s107
      %p109 = scmp.eq.s32.totalorder %s15, 0
      %p110 = por %p108, %p109
      %p111 = scmp.le.s32.totalorder 1, %s9
      %p112 = scmp.lt.s32.totalorder %s9, 3
      %p113 = pnand %p111, %p112
      %p114 = pneg %p113
      // Predicated region
      $region9: #{_lambda_.4} parent=5 // pred_check
        _
      $region10: #{_lambda_.4} parent=5 // pred_check_branch
        %116 = sbr.rel (%p113) target = $region12
      $region11: #{_lambda_.4} parent=5 // pred_region
        %s117 = ssub.s32 %s9, 1
        // Predicated region
        $region13: #{_lambda_.4} parent=11 // pred_check
          %p118 = pneg %p30
        $region14: #{_lambda_.4} parent=11 // pred_check_branch
          %120 = sbr.rel (%p118) target = $region16
        $region15: #{_lambda_.4} parent=11 // pred_region
          _
        $region16: #{_lambda_.4} parent=11 // pred_fallthru
          _
        // Predicated region
        $region17: #{_lambda_.4} parent=11 // pred_check
          %p121 = pneg %p77
        $region18: #{_lambda_.4} parent=11 // pred_check_branch
          %123 = sbr.rel (%p121) target = $region20
        $region19: #{_lambda_.4} parent=11 // pred_region
          _
        $region20: #{_lambda_.4} parent=11 // pred_fallthru
          _
      $region12: #{_lambda_.4} parent=5 // pred_fallthru
        _
      %p124 = scmp.lt.s32.totalorder %s9, 2
      // Predicated region
      $region21: #{_lambda_.4} parent=5 // pred_check
        %p125 = pneg %p124
      $region22: #{_lambda_.4} parent=5 // pred_check_branch
        %127 = sbr.rel (%p125) target = $region24
      $region23: #{_lambda_.4} parent=5 // pred_region
        // Predicated region
        $region25: #{_lambda_.4} parent=23 // pred_check
          %p128 = pneg %p50
        $region26: #{_lambda_.4} parent=23 // pred_check_branch
          %130 = sbr.rel (%p128) target = $region28
        $region27: #{_lambda_.4} parent=23 // pred_region
          %s131 = sand.u32 %s40, 1
          %s132 = sand.u32 %s40, 1
          %s133 = smul.addr %s132, 256
          %s134 = scalar_lea.vmem [#allocation2], %s133
          %s135 = smul.u32 8, %s9
          %s136 = smul.addr %s135, 4
          %s137 = scalar_lea.vmem %s1, %s136
          // Predicated region
          $region29: #{_lambda_.4} parent=27 // pred_check
            _
          $region30: #{_lambda_.4} parent=27 // pred_check_branch
            %139 = sbr.rel (0) target = $region32
          $region31: #{_lambda_.4} parent=27 // pred_region
            // Predicated region
            $region33: #{_lambda_.4} parent=31 // pred_check
              _
            $region34: #{_lambda_.4} parent=31 // pred_check_branch
              %141 = sbr.rel (0) target = $region36
            $region35: #{_lambda_.4} parent=31 // pred_region
              loop: start=0, step=1, limit=1
              $region37: #{_lambda_.4} parent=35 // loop_pre_header
                _
              $region38: #{_lambda_.4} parent=35 // loop_header
                %s143 = sphi 0, %s147
                %p144 = scmp.ge.s32.totalorder %s143, 1
                %s148 = sphi %s137, %s137
                %s149 = sphi %s134, %s134
              $region39: #{_lambda_.4} parent=35 // loop_header_branch
                %146 = sbr.rel (%p144) target = $region43
              $region40: #{_lambda_.4} parent=35 // loop_body
                %v150 = vld [vmem:[%s148] sm:$0xff]
                %151 = vst [vmem:[%s149] sm:$0xff] %v150
                %v152 = vld [vmem:[%s148 + $0x8] sm:$0xff]
                %153 = vst [vmem:[%s149 + $0x8] sm:$0xff] %v152
                %v154 = vld [vmem:[%s148 + $0x10] sm:$0xff]
                %155 = vst [vmem:[%s149 + $0x10] sm:$0xff] %v154
                %v156 = vld [vmem:[%s148 + $0x18] sm:$0xff]
                %157 = vst [vmem:[%s149 + $0x18] sm:$0xff] %v156
                %v158 = vld [vmem:[%s148 + $0x40] sm:$0xff]
                %159 = vst [vmem:[%s149 + $0x20] sm:$0xff] %v158
                %v160 = vld [vmem:[%s148 + $0x48] sm:$0xff]
                %161 = vst [vmem:[%s149 + $0x28] sm:$0xff] %v160
                %v162 = vld [vmem:[%s148 + $0x50] sm:$0xff]
                %163 = vst [vmem:[%s149 + $0x30] sm:$0xff] %v162
                %v164 = vld [vmem:[%s148 + $0x58] sm:$0xff]
                %165 = vst [vmem:[%s149 + $0x38] sm:$0xff] %v164
                %v166 = vld [vmem:[%s148 + $0x80] sm:$0xff]
                %167 = vst [vmem:[%s149 + $0x40] sm:$0xff] %v166
                %v168 = vld [vmem:[%s148 + $0x88] sm:$0xff]
                %169 = vst [vmem:[%s149 + $0x48] sm:$0xff] %v168
                %v170 = vld [vmem:[%s148 + $0x90] sm:$0xff]
                %171 = vst [vmem:[%s149 + $0x50] sm:$0xff] %v170
                %v172 = vld [vmem:[%s148 + $0x98] sm:$0xff]
                %173 = vst [vmem:[%s149 + $0x58] sm:$0xff] %v172
                %v174 = vld [vmem:[%s148 + $0xc0] sm:$0xff]
                %175 = vst [vmem:[%s149 + $0x60] sm:$0xff] %v174
                %v176 = vld [vmem:[%s148 + $0xc8] sm:$0xff]
                %177 = vst [vmem:[%s149 + $0x68] sm:$0xff] %v176
                %v178 = vld [vmem:[%s148 + $0xd0] sm:$0xff]
                %179 = vst [vmem:[%s149 + $0x70] sm:$0xff] %v178
                %v180 = vld [vmem:[%s148 + $0xd8] sm:$0xff]
                %181 = vst [vmem:[%s149 + $0x78] sm:$0xff] %v180
                %v182 = vld [vmem:[%s148 + $0x100] sm:$0xff]
                %183 = vst [vmem:[%s149 + $0x80] sm:$0xff] %v182
                %v184 = vld [vmem:[%s148 + $0x108] sm:$0xff]
                %185 = vst [vmem:[%s149 + $0x88] sm:$0xff] %v184
                %v186 = vld [vmem:[%s148 + $0x110] sm:$0xff]
                %187 = vst [vmem:[%s149 + $0x90] sm:$0xff] %v186
                %v188 = vld [vmem:[%s148 + $0x118] sm:$0xff]
                %189 = vst [vmem:[%s149 + $0x98] sm:$0xff] %v188
                %v190 = vld [vmem:[%s148 + $0x140] sm:$0xff]
                %191 = vst [vmem:[%s149 + $0xa0] sm:$0xff] %v190
                %v192 = vld [vmem:[%s148 + $0x148] sm:$0xff]
                %193 = vst [vmem:[%s149 + $0xa8] sm:$0xff] %v192
                %v194 = vld [vmem:[%s148 + $0x150] sm:$0xff]
                %195 = vst [vmem:[%s149 + $0xb0] sm:$0xff] %v194
                %v196 = vld [vmem:[%s148 + $0x158] sm:$0xff]
                %197 = vst [vmem:[%s149 + $0xb8] sm:$0xff] %v196
                %v198 = vld [vmem:[%s148 + $0x180] sm:$0xff]
                %199 = vst [vmem:[%s149 + $0xc0] sm:$0xff] %v198
                %v200 = vld [vmem:[%s148 + $0x188] sm:$0xff]
                %201 = vst [vmem:[%s149 + $0xc8] sm:$0xff] %v200
                %v202 = vld [vmem:[%s148 + $0x190] sm:$0xff]
                %203 = vst [vmem:[%s149 + $0xd0] sm:$0xff] %v202
                %v204 = vld [vmem:[%s148 + $0x198] sm:$0xff]
                %205 = vst [vmem:[%s149 + $0xd8] sm:$0xff] %v204
                %v206 = vld [vmem:[%s148 + $0x1c0] sm:$0xff]
                %207 = vst [vmem:[%s149 + $0xe0] sm:$0xff] %v206
                %v208 = vld [vmem:[%s148 + $0x1c8] sm:$0xff]
                %209 = vst [vmem:[%s149 + $0xe8] sm:$0xff] %v208
                %v210 = vld [vmem:[%s148 + $0x1d0] sm:$0xff]
                %211 = vst [vmem:[%s149 + $0xf0] sm:$0xff] %v210
                %v212 = vld [vmem:[%s148 + $0x1d8] sm:$0xff]
                %213 = vst [vmem:[%s149 + $0xf8] sm:$0xff] %v212
              $region41: #{_lambda_.4} parent=35 // loop_footer
                %s147 = sadd.s32 1, %s143
              $region42: #{_lambda_.4} parent=35 // loop_footer_branch
                %142 = sbr.rel target = $region38
              $region43: #{_lambda_.4} parent=35 // loop_exit
                _
            $region36: #{_lambda_.4} parent=31 // pred_fallthru
              _
            // Predicated region
            $region44: #{_lambda_.4} parent=31 // pred_check
              _
            $region45: #{_lambda_.4} parent=31 // pred_check_branch
              %215 = sbr.rel target = $region47
            $region46: #{_lambda_.4} parent=31 // pred_region
              _
            $region47: #{_lambda_.4} parent=31 // pred_fallthru
              _
          $region32: #{_lambda_.4} parent=27 // pred_fallthru
            _
          %216 = vnop
        $region28: #{_lambda_.4} parent=23 // pred_fallthru
          _
      $region24: #{_lambda_.4} parent=5 // pred_fallthru
        _
      %p217 = scmp.le.s32.totalorder 1, %s9
      %p218 = scmp.lt.s32.totalorder %s9, 3
      %p219 = pnand %p217, %p218
      %p220 = pneg %p219
      // Predicated region
      $region48: #{_lambda_.4} parent=5 // pred_check
        _
      $region49: #{_lambda_.4} parent=5 // pred_check_branch
        %222 = sbr.rel (%p219) target = $region51
      $region50: #{_lambda_.4} parent=5 // pred_region
        %s223 = ssub.s32 %s9, 1
        %s224 = sand.u32 %s43, 1
        %s225 = sand.u32 %s43, 1
        %s226 = smul.addr %s225, 256
        %s227 = scalar_lea.vmem [#allocation2], %s226
        // Predicated region
        $region52: #{_lambda_.4} parent=50 // pred_check
          %p228 = pneg %p56
        $region53: #{_lambda_.4} parent=50 // pred_check_branch
          %230 = sbr.rel (%p228) target = $region55
        $region54: #{_lambda_.4} parent=50 // pred_region
          _
        $region55: #{_lambda_.4} parent=50 // pred_fallthru
          _
        %p231 = pneg %p30
        %p232 = pneg %p27
        %s233 = sand.u32 %s43, 1
        %s234 = sand.u32 %s43, 1
        %s235 = smul.addr %s234, 256
        %s236 = scalar_lea.vmem [#allocation2], %s235
        %p237 = pneg %p56
        %p238 = pneg %p53
        %p239 = pneg %p77
        %p240 = pneg %p74
        %p241 = pneg %p103
        %p242 = pneg %p100
        %s243 = smul.u32 8, %s14
        %p244 = scmp.lt.s32.totalorder %s243, 15
        %s245 = scalar_select %p244, %s243, 15
        %s246 = smul.addr %s245, 4
        %s247 = scalar_lea.vmem %s3, %s246
        %s248 = smul.u32 8, %s14
        %s249 = smul.u32 8, %s14
        %p250 = scmp.lt.s32.totalorder %s249, 15
        %s251 = scalar_select %p250, %s249, 15
        %s252 = smul.addr %s251, 4
        %s253 = scalar_lea.vmem %s3, %s252
        %s254 = smul.u32 8, %s14
        %v256 = vld [vmem:[%s0] sm:$0xf]
        %v257 = vld [vmem:[%s227] sm:$0xff]
        %v258 = vld [vmem:[%s227 + $0x8] sm:$0xff]
        %v259 = vld [vmem:[%s227 + $0x10] sm:$0xff]
        %v260 = vld [vmem:[%s227 + $0x18] sm:$0xff]
        %v261 = vld [vmem:[%s227 + $0x20] sm:$0xff]
        %v262 = vld [vmem:[%s227 + $0x28] sm:$0xff]
        %v263 = vld [vmem:[%s227 + $0x30] sm:$0xff]
        %v264 = vld [vmem:[%s227 + $0x38] sm:$0xff]
        %v265 = vld [vmem:[%s227 + $0x40] sm:$0xff]
        %v266 = vld [vmem:[%s227 + $0x48] sm:$0xff]
        %v267 = vld [vmem:[%s227 + $0x50] sm:$0xff]
        %v268 = vld [vmem:[%s227 + $0x58] sm:$0xff]
        %v269 = vld [vmem:[%s227 + $0x60] sm:$0xff]
        %v270 = vld [vmem:[%s227 + $0x68] sm:$0xff]
        %v271 = vld [vmem:[%s227 + $0x70] sm:$0xff]
        %v272 = vld [vmem:[%s227 + $0x78] sm:$0xff]
        %v273 = vld [vmem:[%s227 + $0x80] sm:$0xff]
        %v274 = vld [vmem:[%s227 + $0x88] sm:$0xff]
        %v275 = vld [vmem:[%s227 + $0x90] sm:$0xff]
        %v276 = vld [vmem:[%s227 + $0x98] sm:$0xff]
        %v277 = vld [vmem:[%s227 + $0xa0] sm:$0xff]
        %v278 = vld [vmem:[%s227 + $0xa8] sm:$0xff]
        %v279 = vld [vmem:[%s227 + $0xb0] sm:$0xff]
        %v280 = vld [vmem:[%s227 + $0xb8] sm:$0xff]
        %v281 = vld [vmem:[%s227 + $0xc0] sm:$0xff]
        %v282 = vld [vmem:[%s227 + $0xc8] sm:$0xff]
        %v283 = vld [vmem:[%s227 + $0xd0] sm:$0xff]
        %v284 = vld [vmem:[%s227 + $0xd8] sm:$0xff]
        %v285 = vld [vmem:[%s227 + $0xe0] sm:$0xff]
        %v286 = vld [vmem:[%s227 + $0xe8] sm:$0xff]
        %v287 = vld [vmem:[%s227 + $0xf0] sm:$0xff]
        %v288 = vld [vmem:[%s227 + $0xf8] sm:$0xff]
        %v289 = vld [vmem:[%s2] sm:$0xff]
        %291 = vset.pattern.permute.xlu0 0
        %292 = vperm.xlu0 %291, %v289
        %v293 = vpop.permute.xlu0 %292
        %v327 = vunpack.c.l.b16 %v257
        %v328 = vunpack.c.h.b16 %v257
        %v329 = vunpack.c.l.b16 %v258
        %v330 = vunpack.c.h.b16 %v258
        %v331 = vunpack.c.l.b16 %v259
        %v332 = vunpack.c.h.b16 %v259
        %v333 = vunpack.c.l.b16 %v260
        %v334 = vunpack.c.h.b16 %v260
        %v335 = vunpack.c.l.b16 %v261
        %v336 = vunpack.c.h.b16 %v261
        %v337 = vunpack.c.l.b16 %v262
        %v338 = vunpack.c.h.b16 %v262
        %v339 = vunpack.c.l.b16 %v263
        %v340 = vunpack.c.h.b16 %v263
        %v341 = vunpack.c.l.b16 %v264
        %v342 = vunpack.c.h.b16 %v264
        %v343 = vunpack.c.l.b16 %v265
        %v344 = vunpack.c.h.b16 %v265
        %v345 = vunpack.c.l.b16 %v266
        %v346 = vunpack.c.h.b16 %v266
        %v347 = vunpack.c.l.b16 %v267
        %v348 = vunpack.c.h.b16 %v267
        %v349 = vunpack.c.l.b16 %v268
        %v350 = vunpack.c.h.b16 %v268
        %v351 = vunpack.c.l.b16 %v269
        %v352 = vunpack.c.h.b16 %v269
        %v353 = vunpack.c.l.b16 %v270
        %v354 = vunpack.c.h.b16 %v270
        %v355 = vunpack.c.l.b16 %v271
        %v356 = vunpack.c.h.b16 %v271
        %v357 = vunpack.c.l.b16 %v272
        %v358 = vunpack.c.h.b16 %v272
        %v359 = vunpack.c.l.b16 %v273
        %v360 = vunpack.c.h.b16 %v273
        %v361 = vunpack.c.l.b16 %v274
        %v362 = vunpack.c.h.b16 %v274
        %v363 = vunpack.c.l.b16 %v275
        %v364 = vunpack.c.h.b16 %v275
        %v365 = vunpack.c.l.b16 %v276
        %v366 = vunpack.c.h.b16 %v276
        %v367 = vunpack.c.l.b16 %v277
        %v368 = vunpack.c.h.b16 %v277
        %v369 = vunpack.c.l.b16 %v278
        %v370 = vunpack.c.h.b16 %v278
        %v371 = vunpack.c.l.b16 %v279
        %v372 = vunpack.c.h.b16 %v279
        %v373 = vunpack.c.l.b16 %v280
        %v374 = vunpack.c.h.b16 %v280
        %v375 = vunpack.c.l.b16 %v281
        %v376 = vunpack.c.h.b16 %v281
        %v377 = vunpack.c.l.b16 %v282
        %v378 = vunpack.c.h.b16 %v282
        %v379 = vunpack.c.l.b16 %v283
        %v380 = vunpack.c.h.b16 %v283
        %v381 = vunpack.c.l.b16 %v284
        %v382 = vunpack.c.h.b16 %v284
        %v383 = vunpack.c.l.b16 %v285
        %v384 = vunpack.c.h.b16 %v285
        %v385 = vunpack.c.l.b16 %v286
        %v386 = vunpack.c.h.b16 %v286
        %v387 = vunpack.c.l.b16 %v287
        %v388 = vunpack.c.h.b16 %v287
        %v389 = vunpack.c.l.b16 %v288
        %v390 = vunpack.c.h.b16 %v288
        %v391 = vpack.c.b16 %v335, %v327
        %v392 = vpack.c.b16 %v336, %v328
        %v393 = vpack.c.b16 %v337, %v329
        %v394 = vpack.c.b16 %v338, %v330
        %v395 = vpack.c.b16 %v339, %v331
        %v396 = vpack.c.b16 %v340, %v332
        %v397 = vpack.c.b16 %v341, %v333
        %v398 = vpack.c.b16 %v342, %v334
        %v399 = vpack.c.b16 %v351, %v343
        %v400 = vpack.c.b16 %v352, %v344
        %v401 = vpack.c.b16 %v353, %v345
        %v402 = vpack.c.b16 %v354, %v346
        %v403 = vpack.c.b16 %v355, %v347
        %v404 = vpack.c.b16 %v356, %v348
        %v405 = vpack.c.b16 %v357, %v349
        %v406 = vpack.c.b16 %v358, %v350
        %v407 = vpack.c.b16 %v367, %v359
        %v408 = vpack.c.b16 %v368, %v360
        %v409 = vpack.c.b16 %v369, %v361
        %v410 = vpack.c.b16 %v370, %v362
        %v411 = vpack.c.b16 %v371, %v363
        %v412 = vpack.c.b16 %v372, %v364
        %v413 = vpack.c.b16 %v373, %v365
        %v414 = vpack.c.b16 %v374, %v366
        %v415 = vpack.c.b16 %v383, %v375
        %v416 = vpack.c.b16 %v384, %v376
        %v417 = vpack.c.b16 %v385, %v377
        %v418 = vpack.c.b16 %v386, %v378
        %v419 = vpack.c.b16 %v387, %v379
        %v420 = vpack.c.b16 %v388, %v380
        %v421 = vpack.c.b16 %v389, %v381
        %v422 = vpack.c.b16 %v390, %v382
        %vm455 = vcmask 523264
        %v457 = vsel %vm455, %v256, 0
        %459 = vmatprep.subr.bf16.mxu0 %v392
        %460 = vmatpush1.bf16.msra.mxu0 %v391
        %461 = vmatprep.subr.bf16.mxu0 %v400
        %462 = vmatpush1.bf16.msra.mxu0 %v399
        %463 = vmatprep.subr.bf16.mxu0 %v408
        %464 = vmatpush1.bf16.msra.mxu0 %v407
        %465 = vmatprep.subr.bf16.mxu0 %v416
        %466 = vmatpush1.bf16.msra.mxu0 %v415
        %467 = vmatprep.subr.bf16.mxu0 0
        %468 = vmatpush1.bf16.msra.mxu0 0
        %469 = vmatprep.subr.bf16.mxu0 0
        %470 = vmatpush1.bf16.msra.mxu0 0
        %471 = vmatprep.subr.bf16.mxu0 0
        %472 = vmatpush1.bf16.msra.mxu0 0
        %473 = vmatprep.subr.bf16.mxu0 0
        %474 = vmatpush1.bf16.msra.mxu0 0
        %475 = vmatprep.subr.bf16.mxu0 0
        %476 = vmatpush1.bf16.msra.mxu0 0
        %477 = vmatprep.subr.bf16.mxu0 0
        %478 = vmatpush1.bf16.msra.mxu0 0
        %479 = vmatprep.subr.bf16.mxu0 0
        %480 = vmatpush1.bf16.msra.mxu0 0
        %481 = vmatprep.subr.bf16.mxu0 0
        %482 = vmatpush1.bf16.msra.mxu0 0
        %483 = vmatprep.subr.bf16.mxu0 0
        %484 = vmatpush1.bf16.msra.mxu0 0
        %485 = vmatprep.subr.bf16.mxu0 0
        %486 = vmatpush1.bf16.msra.mxu0 0
        %487 = vmatprep.subr.bf16.mxu0 0
        %488 = vmatpush1.bf16.msra.mxu0 0
        %489 = vmatprep.subr.bf16.mxu0 0
        %490 = vmatpush1.bf16.msra.mxu0 0
        %491 = vmatprep.mubr.bf16.mxu0 0
        %492 = vmatmul.mubr.bf16.gmra.mrb[0].mxu0 %v457
        %v493 = vpop.f32.mrb[0].mxu0
        %v494 = vadd.f32 %v293, %v493
        %v495 = vpop.f32.mrb[0].mxu0
        %v496 = vadd.f32 %v293, %v495
        %v497 = vpop.f32.mrb[0].mxu0
        %v498 = vpop.f32.mrb[0].mxu0
        %499 = vdwg.mxu0
        %500 = vmatprep.subr.bf16.mxu0 %v394
        %501 = vmatpush1.bf16.msra.mxu0 %v393
        %502 = vmatprep.subr.bf16.mxu0 %v402
        %503 = vmatpush1.bf16.msra.mxu0 %v401
        %504 = vmatprep.subr.bf16.mxu0 %v410
        %505 = vmatpush1.bf16.msra.mxu0 %v409
        %506 = vmatprep.subr.bf16.mxu0 %v418
        %507 = vmatpush1.bf16.msra.mxu0 %v417
        %508 = vmatprep.subr.bf16.mxu0 0
        %509 = vmatpush1.bf16.msra.mxu0 0
        %510 = vmatprep.subr.bf16.mxu0 0
        %511 = vmatpush1.bf16.msra.mxu0 0
        %512 = vmatprep.subr.bf16.mxu0 0
        %513 = vmatpush1.bf16.msra.mxu0 0
        %514 = vmatprep.subr.bf16.mxu0 0
        %515 = vmatpush1.bf16.msra.mxu0 0
        %516 = vmatprep.subr.bf16.mxu0 0
        %517 = vmatpush1.bf16.msra.mxu0 0
        %518 = vmatprep.subr.bf16.mxu0 0
        %519 = vmatpush1.bf16.msra.mxu0 0
        %520 = vmatprep.subr.bf16.mxu0 0
        %521 = vmatpush1.bf16.msra.mxu0 0
        %522 = vmatprep.subr.bf16.mxu0 0
        %523 = vmatpush1.bf16.msra.mxu0 0
        %524 = vmatprep.subr.bf16.mxu0 0
        %525 = vmatpush1.bf16.msra.mxu0 0
        %526 = vmatprep.subr.bf16.mxu0 0
        %527 = vmatpush1.bf16.msra.mxu0 0
        %528 = vmatprep.subr.bf16.mxu0 0
        %529 = vmatpush1.bf16.msra.mxu0 0
        %530 = vmatprep.subr.bf16.mxu0 0
        %531 = vmatpush1.bf16.msra.mxu0 0
        %532 = vmatprep.mubr.bf16.mxu0 0
        %533 = vmatmul.mubr.bf16.gmra.mrb[0].mxu0 %v457
        %v534 = vpop.f32.mrb[0].mxu0
        %v535 = vadd.f32 %v293, %v534
        %v536 = vpop.f32.mrb[0].mxu0
        %v537 = vadd.f32 %v293, %v536
        %v538 = vpop.f32.mrb[0].mxu0
        %v539 = vpop.f32.mrb[0].mxu0
        %540 = vdwg.mxu0
        %541 = vmatprep.subr.bf16.mxu0 %v396
        %542 = vmatpush1.bf16.msra.mxu0 %v395
        %543 = vmatprep.subr.bf16.mxu0 %v404
        %544 = vmatpush1.bf16.msra.mxu0 %v403
        %545 = vmatprep.subr.bf16.mxu0 %v412
        %546 = vmatpush1.bf16.msra.mxu0 %v411
        %547 = vmatprep.subr.bf16.mxu0 %v420
        %548 = vmatpush1.bf16.msra.mxu0 %v419
        %549 = vmatprep.subr.bf16.mxu0 0
        %550 = vmatpush1.bf16.msra.mxu0 0
        %551 = vmatprep.subr.bf16.mxu0 0
        %552 = vmatpush1.bf16.msra.mxu0 0
        %553 = vmatprep.subr.bf16.mxu0 0
        %554 = vmatpush1.bf16.msra.mxu0 0
        %555 = vmatprep.subr.bf16.mxu0 0
        %556 = vmatpush1.bf16.msra.mxu0 0
        %557 = vmatprep.subr.bf16.mxu0 0
        %558 = vmatpush1.bf16.msra.mxu0 0
        %559 = vmatprep.subr.bf16.mxu0 0
        %560 = vmatpush1.bf16.msra.mxu0 0
        %561 = vmatprep.subr.bf16.mxu0 0
        %562 = vmatpush1.bf16.msra.mxu0 0
        %563 = vmatprep.subr.bf16.mxu0 0
        %564 = vmatpush1.bf16.msra.mxu0 0
        %565 = vmatprep.subr.bf16.mxu0 0
        %566 = vmatpush1.bf16.msra.mxu0 0
        %567 = vmatprep.subr.bf16.mxu0 0
        %568 = vmatpush1.bf16.msra.mxu0 0
        %569 = vmatprep.subr.bf16.mxu0 0
        %570 = vmatpush1.bf16.msra.mxu0 0
        %571 = vmatprep.subr.bf16.mxu0 0
        %572 = vmatpush1.bf16.msra.mxu0 0
        %573 = vmatprep.mubr.bf16.mxu0 0
        %574 = vmatmul.mubr.bf16.gmra.mrb[0].mxu0 %v457
        %v575 = vpop.f32.mrb[0].mxu0
        %v576 = vadd.f32 %v293, %v575
        %v577 = vpop.f32.mrb[0].mxu0
        %v578 = vadd.f32 %v293, %v577
        %v579 = vpop.f32.mrb[0].mxu0
        %v580 = vpop.f32.mrb[0].mxu0
        %581 = vdwg.mxu0
        %582 = vmatprep.subr.bf16.mxu0 %v398
        %583 = vmatpush1.bf16.msra.mxu0 %v397
        %584 = vmatprep.subr.bf16.mxu0 %v406
        %585 = vmatpush1.bf16.msra.mxu0 %v405
        %586 = vmatprep.subr.bf16.mxu0 %v414
        %587 = vmatpush1.bf16.msra.mxu0 %v413
        %588 = vmatprep.subr.bf16.mxu0 %v422
        %589 = vmatpush1.bf16.msra.mxu0 %v421
        %590 = vmatprep.subr.bf16.mxu0 0
        %591 = vmatpush1.bf16.msra.mxu0 0
        %592 = vmatprep.subr.bf16.mxu0 0
        %593 = vmatpush1.bf16.msra.mxu0 0
        %594 = vmatprep.subr.bf16.mxu0 0
        %595 = vmatpush1.bf16.msra.mxu0 0
        %596 = vmatprep.subr.bf16.mxu0 0
        %597 = vmatpush1.bf16.msra.mxu0 0
        %598 = vmatprep.subr.bf16.mxu0 0
        %599 = vmatpush1.bf16.msra.mxu0 0
        %600 = vmatprep.subr.bf16.mxu0 0
        %601 = vmatpush1.bf16.msra.mxu0 0
        %602 = vmatprep.subr.bf16.mxu0 0
        %603 = vmatpush1.bf16.msra.mxu0 0
        %604 = vmatprep.subr.bf16.mxu0 0
        %605 = vmatpush1.bf16.msra.mxu0 0
        %606 = vmatprep.subr.bf16.mxu0 0
        %607 = vmatpush1.bf16.msra.mxu0 0
        %608 = vmatprep.subr.bf16.mxu0 0
        %609 = vmatpush1.bf16.msra.mxu0 0
        %610 = vmatprep.subr.bf16.mxu0 0
        %611 = vmatpush1.bf16.msra.mxu0 0
        %612 = vmatprep.subr.bf16.mxu0 0
        %613 = vmatpush1.bf16.msra.mxu0 0
        %614 = vmatprep.mubr.bf16.mxu0 0
        %615 = vmatmul.mubr.bf16.gmra.mrb[0].mxu0 %v457
        %v616 = vpop.f32.mrb[0].mxu0
        %v617 = vadd.f32 %v293, %v616
        %v618 = vpop.f32.mrb[0].mxu0
        %v619 = vadd.f32 %v293, %v618
        %v620 = vpop.f32.mrb[0].mxu0
        %v621 = vpop.f32.mrb[0].mxu0
        %622 = vdwg.mxu0
        %vm623 = vcmp.ge.f32.partialorder %v494, 0.0
        %vm624 = vcmp.ge.f32.partialorder %v496, 0.0
        %vm625 = vcmp.ge.f32.partialorder %v535, 0.0
        %vm626 = vcmp.ge.f32.partialorder %v537, 0.0
        %vm627 = vcmp.ge.f32.partialorder %v576, 0.0
        %vm628 = vcmp.ge.f32.partialorder %v578, 0.0
        %vm629 = vcmp.ge.f32.partialorder %v617, 0.0
        %vm630 = vcmp.ge.f32.partialorder %v619, 0.0
        %v631 = vmul.f32 %v494, 0.01
        %v632 = vmul.f32 %v496, 0.01
        %v633 = vmul.f32 %v535, 0.01
        %v634 = vmul.f32 %v537, 0.01
        %v635 = vmul.f32 %v576, 0.01
        %v636 = vmul.f32 %v578, 0.01
        %v637 = vmul.f32 %v617, 0.01
        %v638 = vmul.f32 %v619, 0.01
        %v639 = vsel %vm623, %v494, %v631
        %v640 = vsel %vm624, %v496, %v632
        %v641 = vsel %vm625, %v535, %v633
        %v642 = vsel %vm626, %v537, %v634
        %v643 = vsel %vm627, %v576, %v635
        %v644 = vsel %vm628, %v578, %v636
        %v645 = vsel %vm629, %v617, %v637
        %v646 = vsel %vm630, %v619, %v638
        %v647 = vpack.c.bf16 %v639, %v639
        %v648 = vpack.c.bf16 %v640, %v640
        %v649 = vpack.c.bf16 %v641, %v641
        %v650 = vpack.c.bf16 %v642, %v642
        %v651 = vpack.c.bf16 %v643, %v643
        %v652 = vpack.c.bf16 %v644, %v644
        %v653 = vpack.c.bf16 %v645, %v645
        %v654 = vpack.c.bf16 %v646, %v646
        %v663 = vunpack.c.l.b16 %v647
        %v664 = vunpack.c.l.b16 %v648
        %v665 = vunpack.c.l.b16 %v649
        %v666 = vunpack.c.l.b16 %v650
        %v667 = vunpack.c.l.b16 %v651
        %v668 = vunpack.c.l.b16 %v652
        %v669 = vunpack.c.l.b16 %v653
        %v670 = vunpack.c.l.b16 %v654
        %v671 = vpack.c.b16 %v664, %v663
        %v672 = vpack.c.b16 %v666, %v665
        %v673 = vpack.c.b16 %v668, %v667
        %v674 = vpack.c.b16 %v670, %v669
        %679 = vst [vmem:[%s253] sm:$0xff] %v671
        %680 = vst [vmem:[%s253 + $0x8] sm:$0xff] %v672
        %681 = vst [vmem:[%s253 + $0x10] sm:$0xff] %v673
        %682 = vst [vmem:[%s253 + $0x18] sm:$0xff] %v674
        %s683 = smul.u32 8, %s14
        %p684 = scmp.lt.s32.totalorder %s683, 15
        %s685 = scalar_select %p684, %s683, 15
        %s686 = smul.addr %s685, 4
        %s687 = scalar_lea.vmem %s3, %s686
        // Predicated region
        $region56: #{_lambda_.4} parent=50 // pred_check
          %p688 = pneg %p100
        $region57: #{_lambda_.4} parent=50 // pred_check_branch
          %690 = sbr.rel (%p688) target = $region59
        $region58: #{_lambda_.4} parent=50 // pred_region
          %s691 = smul.u32 8, %s14
        $region59: #{_lambda_.4} parent=50 // pred_fallthru
          _
      $region51: #{_lambda_.4} parent=5 // pred_fallthru
        _
      %p692 = scmp.le.s32.totalorder 2, %s9
      // Predicated region
      $region60: #{_lambda_.4} parent=5 // pred_check
        %p693 = pneg %p692
      $region61: #{_lambda_.4} parent=5 // pred_check_branch
        %695 = sbr.rel (%p693) target = $region63
      $region62: #{_lambda_.4} parent=5 // pred_region
        %s696 = ssub.s32 %s9, 2
        // Predicated region
        $region64: #{_lambda_.4} parent=62 // pred_check
          %p697 = pneg %p106
        $region65: #{_lambda_.4} parent=62 // pred_check_branch
          %699 = sbr.rel (%p697) target = $region67
        $region66: #{_lambda_.4} parent=62 // pred_region
          %s700 = smul.u32 8, %s15
          %p701 = scmp.lt.s32.totalorder %s700, 15
          %s702 = scalar_select %p701, %s700, 15
          %s703 = smul.addr %s702, 4
          %s704 = scalar_lea.vmem %s3, %s703
        $region67: #{_lambda_.4} parent=62 // pred_fallthru
          _
      $region63: #{_lambda_.4} parent=5 // pred_fallthru
        _
    $region6: #{_lambda_.4} parent=1 // loop_footer
      %s13 = sadd.s32 1, %s9
    $region7: #{_lambda_.4} parent=1 // loop_footer_branch
      %8 = sbr.rel target = $region3
    $region8: #{_lambda_.4} parent=1 // loop_exit
      _

// kernel: _lambda_.5
$region0: #{_lambda_.5}
  #allocation0 [shape = 'u32[]', space=smem, size = 0x4, offset = 0x4, fixed_abs, tag = 'smem constant byte address 0x4 - core index']
  #allocation1 [shape = 'u32[144,128]{1,0:T(1,128)}', space=vmem, size = 0x12000, scoped, tag = 'internal scratch']
  %s0 = inlined_call_operand.vmem [shape: bf16[16,128], index: 0, kind: input, shape index: {}]
  %s1 = inlined_call_operand.vmem [shape: bf16[128,512], index: 1, kind: input, shape index: {}]
  %s2 = inlined_call_operand.vmem [shape: f32[16,1], index: 2, kind: input, shape index: {}]
  %s3 = inlined_call_operand.vmem [shape: bf16[16,512], index: 3, kind: output, shape index: {}]
  %s4 = sld [smem:[#allocation0]]
  $region22: #{_lambda_.5} parent=0
    _
  %s6 = ssub.s32 1, %s4
  %s7 = scalar_select 0, %s6, %s4
  // Predicated region
  $region2: #{_lambda_.5} parent=0 // pred_check
    _
  $region3: #{_lambda_.5} parent=0 // pred_check_branch
    %9 = sbr.rel (0) target = $region5
  $region4: #{_lambda_.5} parent=0 // pred_region
    _
  $region5: #{_lambda_.5} parent=0 // pred_fallthru
    _
  // Predicated region
  $region6: #{_lambda_.5} parent=0 // pred_check
    _
  $region7: #{_lambda_.5} parent=0 // pred_check_branch
    %11 = sbr.rel (0) target = $region9
  $region8: #{_lambda_.5} parent=0 // pred_region
    _
  $region9: #{_lambda_.5} parent=0 // pred_fallthru
    _
  // Predicated region
  $region10: #{_lambda_.5} parent=0 // pred_check
    _
  $region11: #{_lambda_.5} parent=0 // pred_check_branch
    %13 = sbr.rel (0) target = $region13
  $region12: #{_lambda_.5} parent=0 // pred_region
    _
  $region13: #{_lambda_.5} parent=0 // pred_fallthru
    _
  %v15 = vld [vmem:[%s0] sm:$0xf]
  %v16 = vld [vmem:[%s0 + $0x4] sm:$0xf]
  %v17 = vld [vmem:[%s1] sm:$0xff]
  %v18 = vld [vmem:[%s1 + $0x8] sm:$0xff]
  %v19 = vld [vmem:[%s1 + $0x10] sm:$0xff]
  %v20 = vld [vmem:[%s1 + $0x18] sm:$0xff]
  %v21 = vld [vmem:[%s1 + $0x20] sm:$0xff]
  %v22 = vld [vmem:[%s1 + $0x28] sm:$0xff]
  %v23 = vld [vmem:[%s1 + $0x30] sm:$0xff]
  %v24 = vld [vmem:[%s1 + $0x38] sm:$0xff]
  %v25 = vld [vmem:[%s1 + $0x40] sm:$0xff]
  %v26 = vld [vmem:[%s1 + $0x48] sm:$0xff]
  %v27 = vld [vmem:[%s1 + $0x50] sm:$0xff]
  %v28 = vld [vmem:[%s1 + $0x58] sm:$0xff]
  %v29 = vld [vmem:[%s1 + $0x60] sm:$0xff]
  %v30 = vld [vmem:[%s1 + $0x68] sm:$0xff]
  %v31 = vld [vmem:[%s1 + $0x70] sm:$0xff]
  %v32 = vld [vmem:[%s1 + $0x78] sm:$0xff]
  %v33 = vld [vmem:[%s1 + $0x80] sm:$0xff]
  %v34 = vld [vmem:[%s1 + $0x88] sm:$0xff]
  %v35 = vld [vmem:[%s1 + $0x90] sm:$0xff]
  %v36 = vld [vmem:[%s1 + $0x98] sm:$0xff]
  %v37 = vld [vmem:[%s1 + $0xa0] sm:$0xff]
  %v38 = vld [vmem:[%s1 + $0xa8] sm:$0xff]
  %v39 = vld [vmem:[%s1 + $0xb0] sm:$0xff]
  %v40 = vld [vmem:[%s1 + $0xb8] sm:$0xff]
  %v41 = vld [vmem:[%s1 + $0xc0] sm:$0xff]
  %v42 = vld [vmem:[%s1 + $0xc8] sm:$0xff]
  %v43 = vld [vmem:[%s1 + $0xd0] sm:$0xff]
  %v44 = vld [vmem:[%s1 + $0xd8] sm:$0xff]
  %v45 = vld [vmem:[%s1 + $0xe0] sm:$0xff]
  %v46 = vld [vmem:[%s1 + $0xe8] sm:$0xff]
  %v47 = vld [vmem:[%s1 + $0xf0] sm:$0xff]
  %v48 = vld [vmem:[%s1 + $0xf8] sm:$0xff]
  %v49 = vld [vmem:[%s2] sm:$0xff]
  %v50 = vld [vmem:[%s2 + $0x8] sm:$0xff]
  %52 = vset.pattern.permute.xlu0 0
  %53 = vperm.xlu0 %52, %v49
  %v54 = vpop.permute.xlu0 %53
  %57 = vset.pattern.permute.xlu0 0
  %58 = vperm.xlu0 %57, %v50
  %v59 = vpop.permute.xlu0 %58
  %v63 = vunpack.c.l.b16 %v15
  %v64 = vunpack.c.l.b16 %v16
  %v65 = vpack.c.b16 %v64, %v63
  %v99 = vunpack.c.l.b16 %v17
  %v100 = vunpack.c.h.b16 %v17
  %v101 = vunpack.c.l.b16 %v18
  %v102 = vunpack.c.h.b16 %v18
  %v103 = vunpack.c.l.b16 %v19
  %v104 = vunpack.c.h.b16 %v19
  %v105 = vunpack.c.l.b16 %v20
  %v106 = vunpack.c.h.b16 %v20
  %v107 = vunpack.c.l.b16 %v21
  %v108 = vunpack.c.h.b16 %v21
  %v109 = vunpack.c.l.b16 %v22
  %v110 = vunpack.c.h.b16 %v22
  %v111 = vunpack.c.l.b16 %v23
  %v112 = vunpack.c.h.b16 %v23
  %v113 = vunpack.c.l.b16 %v24
  %v114 = vunpack.c.h.b16 %v24
  %v115 = vunpack.c.l.b16 %v25
  %v116 = vunpack.c.h.b16 %v25
  %v117 = vunpack.c.l.b16 %v26
  %v118 = vunpack.c.h.b16 %v26
  %v119 = vunpack.c.l.b16 %v27
  %v120 = vunpack.c.h.b16 %v27
  %v121 = vunpack.c.l.b16 %v28
  %v122 = vunpack.c.h.b16 %v28
  %v123 = vunpack.c.l.b16 %v29
  %v124 = vunpack.c.h.b16 %v29
  %v125 = vunpack.c.l.b16 %v30
  %v126 = vunpack.c.h.b16 %v30
  %v127 = vunpack.c.l.b16 %v31
  %v128 = vunpack.c.h.b16 %v31
  %v129 = vunpack.c.l.b16 %v32
  %v130 = vunpack.c.h.b16 %v32
  %v131 = vunpack.c.l.b16 %v33
  %v132 = vunpack.c.h.b16 %v33
  %v133 = vunpack.c.l.b16 %v34
  %v134 = vunpack.c.h.b16 %v34
  %v135 = vunpack.c.l.b16 %v35
  %v136 = vunpack.c.h.b16 %v35
  %v137 = vunpack.c.l.b16 %v36
  %v138 = vunpack.c.h.b16 %v36
  %v139 = vunpack.c.l.b16 %v37
  %v140 = vunpack.c.h.b16 %v37
  %v141 = vunpack.c.l.b16 %v38
  %v142 = vunpack.c.h.b16 %v38
  %v143 = vunpack.c.l.b16 %v39
  %v144 = vunpack.c.h.b16 %v39
  %v145 = vunpack.c.l.b16 %v40
  %v146 = vunpack.c.h.b16 %v40
  %v147 = vunpack.c.l.b16 %v41
  %v148 = vunpack.c.h.b16 %v41
  %v149 = vunpack.c.l.b16 %v42
  %v150 = vunpack.c.h.b16 %v42
  %v151 = vunpack.c.l.b16 %v43
  %v152 = vunpack.c.h.b16 %v43
  %v153 = vunpack.c.l.b16 %v44
  %v154 = vunpack.c.h.b16 %v44
  %v155 = vunpack.c.l.b16 %v45
  %v156 = vunpack.c.h.b16 %v45
  %v157 = vunpack.c.l.b16 %v46
  %v158 = vunpack.c.h.b16 %v46
  %v159 = vunpack.c.l.b16 %v47
  %v160 = vunpack.c.h.b16 %v47
  %v161 = vunpack.c.l.b16 %v48
  %v162 = vunpack.c.h.b16 %v48
  %v163 = vpack.c.b16 %v103, %v99
  %v164 = vpack.c.b16 %v104, %v100
  %v165 = vpack.c.b16 %v105, %v101
  %v166 = vpack.c.b16 %v106, %v102
  %v167 = vpack.c.b16 %v111, %v107
  %v168 = vpack.c.b16 %v112, %v108
  %v169 = vpack.c.b16 %v113, %v109
  %v170 = vpack.c.b16 %v114, %v110
  %v171 = vpack.c.b16 %v119, %v115
  %v172 = vpack.c.b16 %v120, %v116
  %v173 = vpack.c.b16 %v121, %v117
  %v174 = vpack.c.b16 %v122, %v118
  %v175 = vpack.c.b16 %v127, %v123
  %v176 = vpack.c.b16 %v128, %v124
  %v177 = vpack.c.b16 %v129, %v125
  %v178 = vpack.c.b16 %v130, %v126
  %v179 = vpack.c.b16 %v135, %v131
  %v180 = vpack.c.b16 %v136, %v132
  %v181 = vpack.c.b16 %v137, %v133
  %v182 = vpack.c.b16 %v138, %v134
  %v183 = vpack.c.b16 %v143, %v139
  %v184 = vpack.c.b16 %v144, %v140
  %v185 = vpack.c.b16 %v145, %v141
  %v186 = vpack.c.b16 %v146, %v142
  %v187 = vpack.c.b16 %v151, %v147
  %v188 = vpack.c.b16 %v152, %v148
  %v189 = vpack.c.b16 %v153, %v149
  %v190 = vpack.c.b16 %v154, %v150
  %v191 = vpack.c.b16 %v159, %v155
  %v192 = vpack.c.b16 %v160, %v156
  %v193 = vpack.c.b16 %v161, %v157
  %v194 = vpack.c.b16 %v162, %v158
  %227 = vmatprep.subr.bf16.mxu0 %v164
  %228 = vmatpush1.bf16.msra.mxu0 %v163
  %229 = vmatprep.subr.bf16.mxu0 %v168
  %230 = vmatpush1.bf16.msra.mxu0 %v167
  %231 = vmatprep.subr.bf16.mxu0 %v172
  %232 = vmatpush1.bf16.msra.mxu0 %v171
  %233 = vmatprep.subr.bf16.mxu0 %v176
  %234 = vmatpush1.bf16.msra.mxu0 %v175
  %235 = vmatprep.subr.bf16.mxu0 %v180
  %236 = vmatpush1.bf16.msra.mxu0 %v179
  %237 = vmatprep.subr.bf16.mxu0 %v184
  %238 = vmatpush1.bf16.msra.mxu0 %v183
  %239 = vmatprep.subr.bf16.mxu0 %v188
  %240 = vmatpush1.bf16.msra.mxu0 %v187
  %241 = vmatprep.subr.bf16.mxu0 %v192
  %242 = vmatpush1.bf16.msra.mxu0 %v191
  %243 = vmatprep.subr.bf16.mxu0 0
  %244 = vmatpush1.bf16.msra.mxu0 0
  %245 = vmatprep.subr.bf16.mxu0 0
  %246 = vmatpush1.bf16.msra.mxu0 0
  %247 = vmatprep.subr.bf16.mxu0 0
  %248 = vmatpush1.bf16.msra.mxu0 0
  %249 = vmatprep.subr.bf16.mxu0 0
  %250 = vmatpush1.bf16.msra.mxu0 0
  %251 = vmatprep.subr.bf16.mxu0 0
  %252 = vmatpush1.bf16.msra.mxu0 0
  %253 = vmatprep.subr.bf16.mxu0 0
  %254 = vmatpush1.bf16.msra.mxu0 0
  %255 = vmatprep.subr.bf16.mxu0 0
  %256 = vmatpush1.bf16.msra.mxu0 0
  %257 = vmatprep.subr.bf16.mxu0 0
  %258 = vmatpush1.bf16.msra.mxu0 0
  %259 = vmatprep.mubr.bf16.mxu0 0
  %260 = vmatmul.mubr.bf16.gmra.mrb[0].mxu0 %v65
  %v261 = vpop.f32.mrb[0].mxu0
  %v262 = vadd.f32 %v54, %v261
  %v263 = vpop.f32.mrb[0].mxu0
  %v264 = vadd.f32 %v54, %v263
  %v265 = vpop.f32.mrb[0].mxu0
  %v266 = vadd.f32 %v59, %v265
  %v267 = vpop.f32.mrb[0].mxu0
  %v268 = vadd.f32 %v59, %v267
  %269 = vdwg.mxu0
  %270 = vmatprep.subr.bf16.mxu0 %v166
  %271 = vmatpush1.bf16.msra.mxu0 %v165
  %272 = vmatprep.subr.bf16.mxu0 %v170
  %273 = vmatpush1.bf16.msra.mxu0 %v169
  %274 = vmatprep.subr.bf16.mxu0 %v174
  %275 = vmatpush1.bf16.msra.mxu0 %v173
  %276 = vmatprep.subr.bf16.mxu0 %v178
  %277 = vmatpush1.bf16.msra.mxu0 %v177
  %278 = vmatprep.subr.bf16.mxu0 %v182
  %279 = vmatpush1.bf16.msra.mxu0 %v181
  %280 = vmatprep.subr.bf16.mxu0 %v186
  %281 = vmatpush1.bf16.msra.mxu0 %v185
  %282 = vmatprep.subr.bf16.mxu0 %v190
  %283 = vmatpush1.bf16.msra.mxu0 %v189
  %284 = vmatprep.subr.bf16.mxu0 %v194
  %285 = vmatpush1.bf16.msra.mxu0 %v193
  %286 = vmatprep.subr.bf16.mxu0 0
  %287 = vmatpush1.bf16.msra.mxu0 0
  %288 = vmatprep.subr.bf16.mxu0 0
  %289 = vmatpush1.bf16.msra.mxu0 0
  %290 = vmatprep.subr.bf16.mxu0 0
  %291 = vmatpush1.bf16.msra.mxu0 0
  %292 = vmatprep.subr.bf16.mxu0 0
  %293 = vmatpush1.bf16.msra.mxu0 0
  %294 = vmatprep.subr.bf16.mxu0 0
  %295 = vmatpush1.bf16.msra.mxu0 0
  %296 = vmatprep.subr.bf16.mxu0 0
  %297 = vmatpush1.bf16.msra.mxu0 0
  %298 = vmatprep.subr.bf16.mxu0 0
  %299 = vmatpush1.bf16.msra.mxu0 0
  %300 = vmatprep.subr.bf16.mxu0 0
  %301 = vmatpush1.bf16.msra.mxu0 0
  %302 = vmatprep.mubr.bf16.mxu0 0
  %303 = vmatmul.mubr.bf16.gmra.mrb[0].mxu0 %v65
  %v304 = vpop.f32.mrb[0].mxu0
  %v305 = vadd.f32 %v54, %v304
  %v306 = vpop.f32.mrb[0].mxu0
  %v307 = vadd.f32 %v54, %v306
  %v308 = vpop.f32.mrb[0].mxu0
  %v309 = vadd.f32 %v59, %v308
  %v310 = vpop.f32.mrb[0].mxu0
  %v311 = vadd.f32 %v59, %v310
  %312 = vdwg.mxu0
  %vm313 = vcmp.ge.f32.partialorder %v262, 0.0
  %vm314 = vcmp.ge.f32.partialorder %v264, 0.0
  %vm315 = vcmp.ge.f32.partialorder %v305, 0.0
  %vm316 = vcmp.ge.f32.partialorder %v307, 0.0
  %vm317 = vcmp.ge.f32.partialorder %v266, 0.0
  %vm318 = vcmp.ge.f32.partialorder %v268, 0.0
  %vm319 = vcmp.ge.f32.partialorder %v309, 0.0
  %vm320 = vcmp.ge.f32.partialorder %v311, 0.0
  %v321 = vmul.f32 %v262, 0.01
  %v322 = vmul.f32 %v264, 0.01
  %v323 = vmul.f32 %v305, 0.01
  %v324 = vmul.f32 %v307, 0.01
  %v325 = vmul.f32 %v266, 0.01
  %v326 = vmul.f32 %v268, 0.01
  %v327 = vmul.f32 %v309, 0.01
  %v328 = vmul.f32 %v311, 0.01
  %v329 = vsel %vm313, %v262, %v321
  %v330 = vsel %vm314, %v264, %v322
  %v331 = vsel %vm315, %v305, %v323
  %v332 = vsel %vm316, %v307, %v324
  %v333 = vsel %vm317, %v266, %v325
  %v334 = vsel %vm318, %v268, %v326
  %v335 = vsel %vm319, %v309, %v327
  %v336 = vsel %vm320, %v311, %v328
  %v337 = vpack.c.bf16 %v333, %v329
  %v338 = vpack.c.bf16 %v334, %v330
  %v339 = vpack.c.bf16 %v335, %v331
  %v340 = vpack.c.bf16 %v336, %v332
  %v345 = vunpack.c.l.b16 %v337
  %v346 = vunpack.c.l.b16 %v338
  %v347 = vunpack.c.l.b16 %v339
  %v348 = vunpack.c.l.b16 %v340
  %v349 = vunpack.c.h.b16 %v337
  %v350 = vunpack.c.h.b16 %v338
  %v351 = vunpack.c.h.b16 %v339
  %v352 = vunpack.c.h.b16 %v340
  %v353 = vpack.c.b16 %v346, %v345
  %v354 = vpack.c.b16 %v348, %v347
  %v355 = vpack.c.b16 %v350, %v349
  %v356 = vpack.c.b16 %v352, %v351
  %361 = vst [vmem:[%s3] sm:$0xff] %v353
  %362 = vst [vmem:[%s3 + $0x8] sm:$0xff] %v354
  %363 = vst [vmem:[%s3 + $0x10] sm:$0xff] %v355
  %364 = vst [vmem:[%s3 + $0x18] sm:$0xff] %v356
  // Predicated region
  $region14: #{_lambda_.5} parent=0 // pred_check
    _
  $region15: #{_lambda_.5} parent=0 // pred_check_branch
    %366 = sbr.rel (0) target = $region17
  $region16: #{_lambda_.5} parent=0 // pred_region
    _
  $region17: #{_lambda_.5} parent=0 // pred_fallthru
    _
  // Predicated region
  $region18: #{_lambda_.5} parent=0 // pred_check
    _
  $region19: #{_lambda_.5} parent=0 // pred_check_branch
    %368 = sbr.rel (0) target = $region21
  $region20: #{_lambda_.5} parent=0 // pred_region
    _
  $region21: #{_lambda_.5} parent=0 // pred_fallthru
    _

// kernel: _lambda_.6
$region0: #{_lambda_.6}
  #allocation0 [shape = 'u32[]', space=smem, size = 0x4, offset = 0x4, fixed_abs, tag = 'smem constant byte address 0x4 - core index']
  #allocation1 [shape = 'u32[144,128]{1,0:T(1,128)}', space=vmem, size = 0x12000, scoped, tag = 'internal scratch']
  %s0 = inlined_call_operand.vmem [shape: bf16[16,144], index: 0, kind: input, shape index: {}]
  %s1 = inlined_call_operand.vmem [shape: bf16[144,128], index: 1, kind: input, shape index: {}]
  %s2 = inlined_call_operand.vmem [shape: f32[16,1], index: 2, kind: input, shape index: {}]
  %s3 = inlined_call_operand.vmem [shape: bf16[16,128], index: 3, kind: output, shape index: {}]
  %s4 = sld [smem:[#allocation0]]
  $region22: #{_lambda_.6} parent=0
    _
  %s6 = ssub.s32 1, %s4
  %s7 = scalar_select 0, %s6, %s4
  // Predicated region
  $region2: #{_lambda_.6} parent=0 // pred_check
    _
  $region3: #{_lambda_.6} parent=0 // pred_check_branch
    %9 = sbr.rel (0) target = $region5
  $region4: #{_lambda_.6} parent=0 // pred_region
    _
  $region5: #{_lambda_.6} parent=0 // pred_fallthru
    _
  // Predicated region
  $region6: #{_lambda_.6} parent=0 // pred_check
    _
  $region7: #{_lambda_.6} parent=0 // pred_check_branch
    %11 = sbr.rel (0) target = $region9
  $region8: #{_lambda_.6} parent=0 // pred_region
    _
  $region9: #{_lambda_.6} parent=0 // pred_fallthru
    _
  // Predicated region
  $region10: #{_lambda_.6} parent=0 // pred_check
    _
  $region11: #{_lambda_.6} parent=0 // pred_check_branch
    %13 = sbr.rel (0) target = $region13
  $region12: #{_lambda_.6} parent=0 // pred_region
    _
  $region13: #{_lambda_.6} parent=0 // pred_fallthru
    _
  %v15 = vld [vmem:[%s0] sm:$0xff]
  %v16 = vld [vmem:[%s0 + $0x8] sm:$0xff]
  %v17 = vld [vmem:[%s1] sm:$0xf]
  %v18 = vld [vmem:[%s1 + $0x4] sm:$0xf]
  %v19 = vld [vmem:[%s1 + $0x8] sm:$0xf]
  %v20 = vld [vmem:[%s1 + $0xc] sm:$0xf]
  %v21 = vld [vmem:[%s1 + $0x10] sm:$0xf]
  %v22 = vld [vmem:[%s1 + $0x14] sm:$0xf]
  %v23 = vld [vmem:[%s1 + $0x18] sm:$0xf]
  %v24 = vld [vmem:[%s1 + $0x1c] sm:$0xf]
  %v25 = vld [vmem:[%s1 + $0x20] sm:$0xf]
  %v26 = vld [vmem:[%s1 + $0x24] sm:$0xf]
  %v27 = vld [vmem:[%s1 + $0x28] sm:$0xf]
  %v28 = vld [vmem:[%s1 + $0x2c] sm:$0xf]
  %v29 = vld [vmem:[%s1 + $0x30] sm:$0xf]
  %v30 = vld [vmem:[%s1 + $0x34] sm:$0xf]
  %v31 = vld [vmem:[%s1 + $0x38] sm:$0xf]
  %v32 = vld [vmem:[%s1 + $0x3c] sm:$0xf]
  %v33 = vld [vmem:[%s1 + $0x40] sm:$0xf]
  %v34 = vld [vmem:[%s1 + $0x44] sm:$0xf]
  %v35 = vld [vmem:[%s2] sm:$0xff]
  %v36 = vld [vmem:[%s2 + $0x8] sm:$0xff]
  %38 = vset.pattern.permute.xlu0 0
  %39 = vperm.xlu0 %38, %v35
  %v40 = vpop.permute.xlu0 %39
  %43 = vset.pattern.permute.xlu0 0
  %44 = vperm.xlu0 %43, %v36
  %v45 = vpop.permute.xlu0 %44
  %v49 = vunpack.c.l.b16 %v15
  %v50 = vunpack.c.h.b16 %v15
  %v51 = vunpack.c.l.b16 %v16
  %v52 = vunpack.c.h.b16 %v16
  %v53 = vpack.c.b16 %v51, %v49
  %v54 = vpack.c.b16 %v52, %v50
  %v74 = vunpack.c.l.b16 %v17
  %v75 = vunpack.c.l.b16 %v18
  %v76 = vunpack.c.l.b16 %v19
  %v77 = vunpack.c.l.b16 %v20
  %v78 = vunpack.c.l.b16 %v21
  %v79 = vunpack.c.l.b16 %v22
  %v80 = vunpack.c.l.b16 %v23
  %v81 = vunpack.c.l.b16 %v24
  %v82 = vunpack.c.l.b16 %v25
  %v83 = vunpack.c.l.b16 %v26
  %v84 = vunpack.c.l.b16 %v27
  %v85 = vunpack.c.l.b16 %v28
  %v86 = vunpack.c.l.b16 %v29
  %v87 = vunpack.c.l.b16 %v30
  %v88 = vunpack.c.l.b16 %v31
  %v89 = vunpack.c.l.b16 %v32
  %v90 = vunpack.c.l.b16 %v33
  %v91 = vunpack.c.l.b16 %v34
  %v92 = vpack.c.b16 %v75, %v74
  %v93 = vpack.c.b16 %v77, %v76
  %v94 = vpack.c.b16 %v79, %v78
  %v95 = vpack.c.b16 %v81, %v80
  %v96 = vpack.c.b16 %v83, %v82
  %v97 = vpack.c.b16 %v85, %v84
  %v98 = vpack.c.b16 %v87, %v86
  %v99 = vpack.c.b16 %v89, %v88
  %v100 = vpack.c.b16 %v91, %v90
  %vm110 = vcmask 130048
  %v112 = vsel %vm110, %v54, 0
  %114 = vmatprep.subr.bf16.mxu0 0
  %115 = vmatpush1.bf16.msra.mxu0 %v92
  %116 = vmatprep.subr.bf16.mxu0 0
  %117 = vmatpush1.bf16.msra.mxu0 %v93
  %118 = vmatprep.subr.bf16.mxu0 0
  %119 = vmatpush1.bf16.msra.mxu0 %v94
  %120 = vmatprep.subr.bf16.mxu0 0
  %121 = vmatpush1.bf16.msra.mxu0 %v95
  %122 = vmatprep.subr.bf16.mxu0 0
  %123 = vmatpush1.bf16.msra.mxu0 %v96
  %124 = vmatprep.subr.bf16.mxu0 0
  %125 = vmatpush1.bf16.msra.mxu0 %v97
  %126 = vmatprep.subr.bf16.mxu0 0
  %127 = vmatpush1.bf16.msra.mxu0 %v98
  %128 = vmatprep.subr.bf16.mxu0 0
  %129 = vmatpush1.bf16.msra.mxu0 %v99
  %130 = vmatprep.subr.bf16.mxu0 0
  %131 = vmatpush1.bf16.msra.mxu0 %v100
  %132 = vmatprep.subr.bf16.mxu0 0
  %133 = vmatpush1.bf16.msra.mxu0 0
  %134 = vmatprep.subr.bf16.mxu0 0
  %135 = vmatpush1.bf16.msra.mxu0 0
  %136 = vmatprep.subr.bf16.mxu0 0
  %137 = vmatpush1.bf16.msra.mxu0 0
  %138 = vmatprep.subr.bf16.mxu0 0
  %139 = vmatpush1.bf16.msra.mxu0 0
  %140 = vmatprep.subr.bf16.mxu0 0
  %141 = vmatpush1.bf16.msra.mxu0 0
  %142 = vmatprep.subr.bf16.mxu0 0
  %143 = vmatpush1.bf16.msra.mxu0 0
  %144 = vmatprep.subr.bf16.mxu0 0
  %145 = vmatpush1.bf16.msra.mxu0 0
  %146 = vmatprep.mubr.bf16.mxu0 %v112
  %147 = vmatmul.mubr.bf16.gmra.mrb[0].mxu0 %v53
  %v148 = vpop.f32.mrb[0].mxu0
  %v149 = vadd.f32 %v40, %v148
  %v150 = vpop.f32.mrb[0].mxu0
  %v151 = vpop.f32.mrb[0].mxu0
  %v152 = vadd.f32 %v45, %v151
  %v153 = vpop.f32.mrb[0].mxu0
  %154 = vdwg.mxu0
  %vm155 = vcmp.ge.f32.partialorder %v149, 0.0
  %vm156 = vcmp.ge.f32.partialorder %v152, 0.0
  %v157 = vmul.f32 %v149, 0.01
  %v158 = vmul.f32 %v152, 0.01
  %v159 = vsel %vm155, %v149, %v157
  %v160 = vsel %vm156, %v152, %v158
  %v161 = vpack.c.bf16 %v160, %v159
  %v163 = vunpack.c.l.b16 %v161
  %v164 = vunpack.c.h.b16 %v161
  %v165 = vpack.c.b16 %v163, %v163
  %v166 = vpack.c.b16 %v164, %v164
  %169 = vst [vmem:[%s3] sm:$0xf] %v165
  %170 = vst [vmem:[%s3 + $0x4] sm:$0xf] %v166
  // Predicated region
  $region14: #{_lambda_.6} parent=0 // pred_check
    _
  $region15: #{_lambda_.6} parent=0 // pred_check_branch
    %172 = sbr.rel (0) target = $region17
  $region16: #{_lambda_.6} parent=0 // pred_region
    _
  $region17: #{_lambda_.6} parent=0 // pred_fallthru
    _
  // Predicated region
  $region18: #{_lambda_.6} parent=0 // pred_check
    _
  $region19: #{_lambda_.6} parent=0 // pred_check_branch
    %174 = sbr.rel (0) target = $region21
  $region20: #{_lambda_.6} parent=0 // pred_region
    _
  $region21: #{_lambda_.6} parent=0 // pred_fallthru
    _

// kernel: _lambda_.7
$region0: #{_lambda_.7}
  #allocation0 [shape = 'u32[]', space=smem, size = 0x4, offset = 0x4, fixed_abs, tag = 'smem constant byte address 0x4 - core index']
  #allocation1 [shape = 'u32[144,128]{1,0:T(1,128)}', space=vmem, size = 0x12000, scoped, tag = 'internal scratch']
  %s0 = inlined_call_operand.vmem [shape: bf16[32,144], index: 0, kind: input, shape index: {}]
  %s1 = inlined_call_operand.vmem [shape: bf16[144,128], index: 1, kind: input, shape index: {}]
  %s2 = inlined_call_operand.vmem [shape: f32[32,1], index: 2, kind: input, shape index: {}]
  %s3 = inlined_call_operand.vmem [shape: f32[32,128], index: 3, kind: output, shape index: {}]
  %s4 = sld [smem:[#allocation0]]
  $region22: #{_lambda_.7} parent=0
    _
  %s6 = ssub.s32 1, %s4
  %s7 = scalar_select 0, %s6, %s4
  // Predicated region
  $region2: #{_lambda_.7} parent=0 // pred_check
    _
  $region3: #{_lambda_.7} parent=0 // pred_check_branch
    %9 = sbr.rel (0) target = $region5
  $region4: #{_lambda_.7} parent=0 // pred_region
    _
  $region5: #{_lambda_.7} parent=0 // pred_fallthru
    _
  // Predicated region
  $region6: #{_lambda_.7} parent=0 // pred_check
    _
  $region7: #{_lambda_.7} parent=0 // pred_check_branch
    %11 = sbr.rel (0) target = $region9
  $region8: #{_lambda_.7} parent=0 // pred_region
    _
  $region9: #{_lambda_.7} parent=0 // pred_fallthru
    _
  // Predicated region
  $region10: #{_lambda_.7} parent=0 // pred_check
    _
  $region11: #{_lambda_.7} parent=0 // pred_check_branch
    %13 = sbr.rel (0) target = $region13
  $region12: #{_lambda_.7} parent=0 // pred_region
    _
  $region13: #{_lambda_.7} parent=0 // pred_fallthru
    _
  %v15 = vld [vmem:[%s0] sm:$0xff]
  %v16 = vld [vmem:[%s0 + $0x8] sm:$0xff]
  %v17 = vld [vmem:[%s0 + $0x10] sm:$0xff]
  %v18 = vld [vmem:[%s0 + $0x18] sm:$0xff]
  %v19 = vld [vmem:[%s1] sm:$0xf]
  %v20 = vld [vmem:[%s1 + $0x4] sm:$0xf]
  %v21 = vld [vmem:[%s1 + $0x8] sm:$0xf]
  %v22 = vld [vmem:[%s1 + $0xc] sm:$0xf]
  %v23 = vld [vmem:[%s1 + $0x10] sm:$0xf]
  %v24 = vld [vmem:[%s1 + $0x14] sm:$0xf]
  %v25 = vld [vmem:[%s1 + $0x18] sm:$0xf]
  %v26 = vld [vmem:[%s1 + $0x1c] sm:$0xf]
  %v27 = vld [vmem:[%s1 + $0x20] sm:$0xf]
  %v28 = vld [vmem:[%s1 + $0x24] sm:$0xf]
  %v29 = vld [vmem:[%s1 + $0x28] sm:$0xf]
  %v30 = vld [vmem:[%s1 + $0x2c] sm:$0xf]
  %v31 = vld [vmem:[%s1 + $0x30] sm:$0xf]
  %v32 = vld [vmem:[%s1 + $0x34] sm:$0xf]
  %v33 = vld [vmem:[%s1 + $0x38] sm:$0xf]
  %v34 = vld [vmem:[%s1 + $0x3c] sm:$0xf]
  %v35 = vld [vmem:[%s1 + $0x40] sm:$0xf]
  %v36 = vld [vmem:[%s1 + $0x44] sm:$0xf]
  %v37 = vld [vmem:[%s2] sm:$0xff]
  %v38 = vld [vmem:[%s2 + $0x8] sm:$0xff]
  %v39 = vld [vmem:[%s2 + $0x10] sm:$0xff]
  %v40 = vld [vmem:[%s2 + $0x18] sm:$0xff]
  %42 = vset.pattern.permute.xlu0 0
  %43 = vperm.xlu0 %42, %v37
  %v44 = vpop.permute.xlu0 %43
  %47 = vset.pattern.permute.xlu0 0
  %48 = vperm.xlu0 %47, %v38
  %v49 = vpop.permute.xlu0 %48
  %52 = vset.pattern.permute.xlu0 0
  %53 = vperm.xlu0 %52, %v39
  %v54 = vpop.permute.xlu0 %53
  %57 = vset.pattern.permute.xlu0 0
  %58 = vperm.xlu0 %57, %v40
  %v59 = vpop.permute.xlu0 %58
  %v65 = vunpack.c.l.b16 %v15
  %v66 = vunpack.c.h.b16 %v15
  %v67 = vunpack.c.l.b16 %v16
  %v68 = vunpack.c.h.b16 %v16
  %v69 = vunpack.c.l.b16 %v17
  %v70 = vunpack.c.h.b16 %v17
  %v71 = vunpack.c.l.b16 %v18
  %v72 = vunpack.c.h.b16 %v18
  %v73 = vpack.c.b16 %v67, %v65
  %v74 = vpack.c.b16 %v68, %v66
  %v75 = vpack.c.b16 %v71, %v69
  %v76 = vpack.c.b16 %v72, %v70
  %v97 = vunpack.c.l.b16 %v19
  %v98 = vunpack.c.l.b16 %v20
  %v99 = vunpack.c.l.b16 %v21
  %v100 = vunpack.c.l.b16 %v22
  %v101 = vunpack.c.l.b16 %v23
  %v102 = vunpack.c.l.b16 %v24
  %v103 = vunpack.c.l.b16 %v25
  %v104 = vunpack.c.l.b16 %v26
  %v105 = vunpack.c.l.b16 %v27
  %v106 = vunpack.c.l.b16 %v28
  %v107 = vunpack.c.l.b16 %v29
  %v108 = vunpack.c.l.b16 %v30
  %v109 = vunpack.c.l.b16 %v31
  %v110 = vunpack.c.l.b16 %v32
  %v111 = vunpack.c.l.b16 %v33
  %v112 = vunpack.c.l.b16 %v34
  %v113 = vunpack.c.l.b16 %v35
  %v114 = vunpack.c.l.b16 %v36
  %v115 = vpack.c.b16 %v98, %v97
  %v116 = vpack.c.b16 %v100, %v99
  %v117 = vpack.c.b16 %v102, %v101
  %v118 = vpack.c.b16 %v104, %v103
  %v119 = vpack.c.b16 %v106, %v105
  %v120 = vpack.c.b16 %v108, %v107
  %v121 = vpack.c.b16 %v110, %v109
  %v122 = vpack.c.b16 %v112, %v111
  %v123 = vpack.c.b16 %v114, %v113
  %vm133 = vcmask 130048
  %v135 = vsel %vm133, %v74, 0
  %v138 = vsel %vm133, %v76, 0
  %140 = vmatprep.subr.bf16.mxu0 0
  %141 = vmatpush1.bf16.msra.mxu0 %v115
  %142 = vmatprep.subr.bf16.mxu0 0
  %143 = vmatpush1.bf16.msra.mxu0 %v116
  %144 = vmatprep.subr.bf16.mxu0 0
  %145 = vmatpush1.bf16.msra.mxu0 %v117
  %146 = vmatprep.subr.bf16.mxu0 0
  %147 = vmatpush1.bf16.msra.mxu0 %v118
  %148 = vmatprep.subr.bf16.mxu0 0
  %149 = vmatpush1.bf16.msra.mxu0 %v119
  %150 = vmatprep.subr.bf16.mxu0 0
  %151 = vmatpush1.bf16.msra.mxu0 %v120
  %152 = vmatprep.subr.bf16.mxu0 0
  %153 = vmatpush1.bf16.msra.mxu0 %v121
  %154 = vmatprep.subr.bf16.mxu0 0
  %155 = vmatpush1.bf16.msra.mxu0 %v122
  %156 = vmatprep.subr.bf16.mxu0 0
  %157 = vmatpush1.bf16.msra.mxu0 %v123
  %158 = vmatprep.subr.bf16.mxu0 0
  %159 = vmatpush1.bf16.msra.mxu0 0
  %160 = vmatprep.subr.bf16.mxu0 0
  %161 = vmatpush1.bf16.msra.mxu0 0
  %162 = vmatprep.subr.bf16.mxu0 0
  %163 = vmatpush1.bf16.msra.mxu0 0
  %164 = vmatprep.subr.bf16.mxu0 0
  %165 = vmatpush1.bf16.msra.mxu0 0
  %166 = vmatprep.subr.bf16.mxu0 0
  %167 = vmatpush1.bf16.msra.mxu0 0
  %168 = vmatprep.subr.bf16.mxu0 0
  %169 = vmatpush1.bf16.msra.mxu0 0
  %170 = vmatprep.subr.bf16.mxu0 0
  %171 = vmatpush1.bf16.msra.mxu0 0
  %172 = vmatprep.mubr.bf16.mxu0 %v135
  %173 = vmatmul.mubr.bf16.gmra.mrb[0].mxu0 %v73
  %v174 = vpop.f32.mrb[0].mxu0
  %v175 = vadd.f32 %v44, %v174
  %v176 = vpop.f32.mrb[0].mxu0
  %v177 = vpop.f32.mrb[0].mxu0
  %v178 = vadd.f32 %v49, %v177
  %v179 = vpop.f32.mrb[0].mxu0
  %180 = vmatprep.mubr.bf16.mxu0 %v138
  %181 = vmatmul.mubr.bf16.gmra.mrb[0].mxu0 %v75
  %v182 = vpop.f32.mrb[0].mxu0
  %v183 = vadd.f32 %v54, %v182
  %v184 = vpop.f32.mrb[0].mxu0
  %v185 = vpop.f32.mrb[0].mxu0
  %v186 = vadd.f32 %v59, %v185
  %v187 = vpop.f32.mrb[0].mxu0
  %188 = vdwg.mxu0
  %vm189 = vcmp.ge.f32.partialorder %v175, 0.0
  %vm190 = vcmp.ge.f32.partialorder %v178, 0.0
  %vm191 = vcmp.ge.f32.partialorder %v183, 0.0
  %vm192 = vcmp.ge.f32.partialorder %v186, 0.0
  %v193 = vmul.f32 %v175, 0.01
  %v194 = vmul.f32 %v178, 0.01
  %v195 = vmul.f32 %v183, 0.01
  %v196 = vmul.f32 %v186, 0.01
  %v197 = vsel %vm189, %v175, %v193
  %v198 = vsel %vm190, %v178, %v194
  %v199 = vsel %vm191, %v183, %v195
  %v200 = vsel %vm192, %v186, %v196
  %201 = vst [vmem:[%s3] sm:$0xff] %v197
  %202 = vst [vmem:[%s3 + $0x8] sm:$0xff] %v198
  %203 = vst [vmem:[%s3 + $0x10] sm:$0xff] %v199
  %204 = vst [vmem:[%s3 + $0x18] sm:$0xff] %v200
  // Predicated region
  $region14: #{_lambda_.7} parent=0 // pred_check
    _
  $region15: #{_lambda_.7} parent=0 // pred_check_branch
    %206 = sbr.rel (0) target = $region17
  $region16: #{_lambda_.7} parent=0 // pred_region
    _
  $region17: #{_lambda_.7} parent=0 // pred_fallthru
    _
  // Predicated region
  $region18: #{_lambda_.7} parent=0 // pred_check
    _
  $region19: #{_lambda_.7} parent=0 // pred_check_branch
    %208 = sbr.rel (0) target = $region21
  $region20: #{_lambda_.7} parent=0 // pred_region
    _
  $region21: #{_lambda_.7} parent=0 // pred_fallthru
    _

</llo_original>
